<compile_context>
chip_gen: v5e
topology: v5e:2x2
jax: 0.10.0
libtpu: 0.0.40
codegen_flags: <defaults>
</compile_context>

<pallas_src>
import jax
import jax.numpy as jnp
from jax import lax
from jax.experimental import pallas as pl
from jax.experimental.pallas import tpu as pltpu


# ----------------------------------------------------------------------------
# Fused kernel: GRU over the question, attention pooling over image objects,
# q_net / v_net FCNNs, elementwise fusion, classifier head (tiled over A).
# ----------------------------------------------------------------------------
def vizwiz_fused_kernel(
        # inputs (constant blocks across the answer grid)
        x_ref,                               # (S*Bp, E) time-major embeddings
        v_ref,                               # (Bp, N, F) image features
        wih_ref,                             # (E, 3H) packed input weights r|z|n
        whh_ref,                             # (H, 3H) packed recurrent weights
        bin_ref,                             # (1, 3H) bih (+ bhh for r,z) folded
        bhn_ref,                             # (1, H)  hidden bias of n gate
        att_w1v_ref, att_w1q_ref, att_b1_ref,  # (F,H), (H,H), (1,H)
        att_w2_ref,                          # (1, H) row form of (H,1) weight
        qnet_w_ref, qnet_b_ref,              # (H, H), (1, H)
        vnet_w_ref, vnet_b_ref,              # (F, H), (1, H)
        cls_w1_ref, cls_b1_ref,              # (H, 2H), (1, 2H)
        # inputs tiled over the answer grid axis
        cls_w2_ref, cls_b2_ref,              # (2H, tA), (1, tA)
        # outputs
        out_ref,                             # (Bp, tA)
        # scratch (persists across grid steps)
        gi_sc,                               # (S*Bp, 3H) hoisted input proj.
        h1_sc,                               # (Bp, 2H)  classifier hidden
):
    Bp, N, F = v_ref.shape
    H = whh_ref.shape[0]
    S = x_ref.shape[0] // Bp

    # ---- Prologue: everything up to the classifier hidden, once per call ----
    @pl.when(pl.program_id(0) == 0)
    def _prologue():
        # GRU input projection hoisted out of the serial loop: one wide
        # (S*Bp,E)@(E,3H) matmul, lane-dense 3H output, biases folded in.
        gi_sc[...] = (jnp.dot(x_ref[...], wih_ref[...],
                              preferred_element_type=jnp.float32)
                      + bin_ref[...])

        bhh_n = jnp.broadcast_to(bhn_ref[...], (Bp, H))  # hoisted broadcast

        def step(t, h):
            # Single fused (Bp,H)@(H,3H) recurrent push (serial critical path).
            gh = jnp.dot(h, whh_ref[...], preferred_element_type=jnp.float32)
            gi = gi_sc[pl.ds(t * Bp, Bp), :]             # 8-aligned sublanes
            r = jax.nn.sigmoid(gi[:, :H] + gh[:, :H])
            z = jax.nn.sigmoid(gi[:, H:2 * H] + gh[:, H:2 * H])
            n = jnp.tanh(gi[:, 2 * H:] + r * (gh[:, 2 * H:] + bhh_n))
            return (1.0 - z) * n + z * h

        # Unidirectional GRU -> q_emb is the last forward hidden state.
        q_emb = lax.fori_loop(0, S, step, jnp.zeros((Bp, H), jnp.float32),
                              unroll=True)

        # ---- Attention over image objects ----------------------------------
        v = v_ref[...]                                               # (Bp,N,F)
        # cat(v, q) @ W1 == v @ W1v + q @ W1q (concat folded into split weights)
        jv = jnp.dot(v.reshape(Bp * N, F), att_w1v_ref[...],
                     preferred_element_type=jnp.float32).reshape(Bp, N, H)
        jq = jnp.dot(q_emb, att_w1q_ref[...],
                     preferred_element_type=jnp.float32)             # (Bp, H)
        joint = jnp.maximum(jv + jq[:, None, :] + att_b1_ref[...][None, :, :],
                            0.0)

        # 1-wide logit matmul as VPU multiply + cross-lane reduce (XLU);
        # the scalar logit bias cancels under softmax and is omitted.
        logits = jnp.sum(joint * att_w2_ref[...][None, :, :], axis=-1)  # (Bp,N)

        m = jnp.max(logits, axis=1, keepdims=True)
        e = jnp.exp(logits - m)
        att = e / jnp.sum(e, axis=1, keepdims=True)      # exact divide

        # v_emb = (att * v).sum(1) as an MXU batched contraction, F-wide output.
        v_emb = jnp.einsum('bqn,bnf->bqf', att[:, None, :], v,
                           preferred_element_type=jnp.float32).reshape(Bp, F)

        # ---- q_net / v_net / first classifier layer (dropout == identity) --
        q_repr = jnp.maximum(
            jnp.dot(q_emb, qnet_w_ref[...], preferred_element_type=jnp.float32)
            + qnet_b_ref[...], 0.0)
        v_repr = jnp.maximum(
            jnp.dot(v_emb, vnet_w_ref[...], preferred_element_type=jnp.float32)
            + vnet_b_ref[...], 0.0)
        joint_repr = q_repr * v_repr
        h1_sc[...] = jnp.maximum(
            jnp.dot(joint_repr, cls_w1_ref[...],
                    preferred_element_type=jnp.float32)
            + cls_b1_ref[...], 0.0)

    # ---- Per-grid-step: classifier output layer on this answer tile ---------
    out_ref[...] = (
        jnp.dot(h1_sc[...], cls_w2_ref[...], preferred_element_type=jnp.float32)
        + cls_b2_ref[...])


# ----------------------------------------------------------------------------
# Parameter init (deterministic, in-script), kernel-layout prep, forward pass.
# ----------------------------------------------------------------------------
def init_params(key, num_tokens, embed_dim, num_hid, num_img_feats, num_answers):
    keys = jax.random.split(key, 20)

    def w(k, shape, scale=0.1):
        return (scale * jax.random.normal(k, shape)).astype(jnp.float32)

    params = {}
    emb = w(keys[0], (num_tokens + 1, embed_dim))
    emb = emb.at[num_tokens].set(0.0)                # padding_idx row is zeros
    params['emb'] = emb
    # GRU, PyTorch gate order (r, z, n); stored input-major as (in_dim, 3H)
    params['gru_wih'] = w(keys[1], (embed_dim, 3 * num_hid))
    params['gru_whh'] = w(keys[2], (num_hid, 3 * num_hid))
    params['gru_bih'] = w(keys[3], (1, 3 * num_hid))
    params['gru_bhh'] = w(keys[4], (1, 3 * num_hid))
    # Attention: Linear(F+H, H) split into v-part and q-part
    params['att_w1v'] = w(keys[5], (num_img_feats, num_hid))
    params['att_w1q'] = w(keys[6], (num_hid, num_hid))
    params['att_b1'] = w(keys[7], (1, num_hid))
    params['att_w2'] = w(keys[8], (num_hid, 1))
    params['att_b2'] = w(keys[9], (1, 1))
    # q_net / v_net FCNNs
    params['qnet_w'] = w(keys[10], (num_hid, num_hid))
    params['qnet_b'] = w(keys[11], (1, num_hid))
    params['vnet_w'] = w(keys[12], (num_img_feats, num_hid))
    params['vnet_b'] = w(keys[13], (1, num_hid))
    # classifier
    params['cls_w1'] = w(keys[14], (num_hid, 2 * num_hid))
    params['cls_b1'] = w(keys[15], (1, num_hid * 2))
    params['cls_w2'] = w(keys[16], (2 * num_hid, num_answers))
    params['cls_b2'] = w(keys[17], (1, num_answers))
    return params


def _prepare_kernel_params(p):
    """Re-layout PyTorch-style params for the fused kernel.

    GRU weights stay packed r|z|n column-wise (one fused matmul per step / for
    the hoisted input projection); the r/z input+hidden biases are folded into
    the packed input bias; the attention logit weight becomes a (1,H) row.
    Done once at load time in a real deployment.
    TODO(synk): cast the large matrices to bf16 here at production shapes.
    """
    H = p['qnet_w'].shape[0]
    bih, bhh = p['gru_bih'], p['gru_bhh']
    b_in = jnp.concatenate(
        [bih[:, :2 * H] + bhh[:, :2 * H], bih[:, 2 * H:]], axis=1)  # (1, 3H)
    return dict(
        gru_wih=p['gru_wih'], gru_whh=p['gru_whh'],
        gru_bin=b_in, gru_bhn=bhh[:, 2 * H:],
        att_w1v=p['att_w1v'], att_w1q=p['att_w1q'], att_b1=p['att_b1'],
        att_w2=p['att_w2'].T,                 # (H,1) -> (1,H)
        qnet_w=p['qnet_w'], qnet_b=p['qnet_b'],
        vnet_w=p['vnet_w'], vnet_b=p['vnet_b'],
        cls_w1=p['cls_w1'], cls_b1=p['cls_b1'],
        cls_w2=p['cls_w2'], cls_b2=p['cls_b2'],
    )


def _const_spec(a):
    """Whole-array block, constant across the answer grid axis."""
    nd = a.ndim
    return pl.BlockSpec(a.shape, lambda j, _nd=nd: (0,) * _nd)


def vizwiznet_forward(params, v, q_tokens, *, answer_tile=128):
    # WordEmbedding: gather + dropout(p=0) == identity (glue, not hot path).
    w_emb = jnp.take(params['emb'], q_tokens, axis=0)        # (B, S, E)
    B, S, E = w_emb.shape

    # Pad batch to a full 8-sublane multiple; rows are independent throughout.
    Bp = ((B + 7) // 8) * 8
    w_emb_p = jnp.pad(w_emb, ((0, Bp - B), (0, 0), (0, 0)))
    v_p = jnp.pad(v, ((0, Bp - B), (0, 0), (0, 0)))
    # Time-major flatten done in the wrapper (free layout plumbing).
    x2d = jnp.transpose(w_emb_p, (1, 0, 2)).reshape(S * Bp, E)

    kp = _prepare_kernel_params(params)
    H = kp['qnet_w'].shape[0]
    A = kp['cls_w2'].shape[1]
    tA = A if A <= answer_tile else answer_tile
    grid = (pl.cdiv(A, tA),)

    const_args = [x2d, v_p,
                  kp['gru_wih'], kp['gru_whh'], kp['gru_bin'], kp['gru_bhn'],
                  kp['att_w1v'], kp['att_w1q'], kp['att_b1'], kp['att_w2'],
                  kp['qnet_w'], kp['qnet_b'], kp['vnet_w'], kp['vnet_b'],
                  kp['cls_w1'], kp['cls_b1']]
    tiled_args = [kp['cls_w2'], kp['cls_b2']]
    args = const_args + tiled_args

    in_specs = ([_const_spec(a) for a in const_args]
                + [pl.BlockSpec((2 * H, tA), lambda j: (0, j)),
                   pl.BlockSpec((1, tA), lambda j: (0, j))])
    out_spec = pl.BlockSpec((Bp, tA), lambda j: (0, j))
    scratch = [pltpu.VMEM((S * Bp, 3 * H), jnp.float32),
               pltpu.VMEM((Bp, 2 * H), jnp.float32)]

    # VMEM limit from the actual footprint (double-buffered), clamped to the
    # smallest physical VMEM across supported chips (v7x: 64 MiB).
    in_bytes = sum(int(a.size) * a.dtype.itemsize for a in args)
    out_bytes = Bp * A * 4
    scratch_bytes = (S * Bp * 3 * H + Bp * 2 * H) * 4
    need = 2 * (in_bytes + out_bytes) + scratch_bytes + (4 << 20)
    vmem_limit = int(min(max(need, 32 << 20), 64 << 20))

    out = pl.pallas_call(
        vizwiz_fused_kernel,
        out_shape=jax.ShapeDtypeStruct((Bp, A), jnp.float32),
        grid_spec=pltpu.PrefetchScalarGridSpec(
            num_scalar_prefetch=0,
            grid=grid,
            in_specs=in_specs,
            out_specs=out_spec,
            scratch_shapes=scratch),
        # "arbitrary": the pl.when-gated prologue writes scratch consumed by
        # later answer tiles, so the axis must run sequentially on one core.
        # TODO(synk): for v7x megacore, mark "parallel" and keep h1 in
        # pltpu.VMEM_SHARED (or recompute the prologue per core).
        compiler_params=pltpu.CompilerParams(
            dimension_semantics=("arbitrary",),
            vmem_limit_bytes=vmem_limit),
    )(*args)
    return out[:B]


# ----------------------------------------------------------------------------
# Pure-JAX reference (same math, no Pallas) for a sanity check.
# ----------------------------------------------------------------------------
def reference_forward(p, v, q_tokens):
    H = p['qnet_w'].shape[0]
    w_emb = jnp.take(p['emb'], q_tokens, axis=0)
    B, S, E = w_emb.shape

    def step(h, x_t):
        gi = x_t @ p['gru_wih'] + p['gru_bih']
        gh = h @ p['gru_whh'] + p['gru_bhh']
        r = jax.nn.sigmoid(gi[:, :H] + gh[:, :H])
        z = jax.nn.sigmoid(gi[:, H:2 * H] + gh[:, H:2 * H])
        n = jnp.tanh(gi[:, 2 * H:] + r * gh[:, 2 * H:])
        return (1.0 - z) * n + z * h, None

    h, _ = lax.scan(step, jnp.zeros((B, H), jnp.float32),
                    jnp.transpose(w_emb, (1, 0, 2)))
    q_emb = h
    joint = jnp.maximum(
        jnp.einsum('bnf,fh->bnh', v, p['att_w1v'])
        + (q_emb @ p['att_w1q'])[:, None, :] + p['att_b1'][None], 0.0)
    logits = jnp.einsum('bnh,hk->bnk', joint, p['att_w2']) + p['att_b2'][None]
    att = jax.nn.softmax(logits, axis=1)
    v_emb = jnp.sum(att * v, axis=1)
    q_repr = jnp.maximum(q_emb @ p['qnet_w'] + p['qnet_b'], 0.0)
    v_repr = jnp.maximum(v_emb @ p['vnet_w'] + p['vnet_b'], 0.0)
    jr = q_repr * v_repr
    hh = jnp.maximum(jr @ p['cls_w1'] + p['cls_b1'], 0.0)
    return hh @ p['cls_w2'] + p['cls_b2']


if __name__ == "__main__":
    # Small, self-consistent shapes (A=256 exercises the 2-tile answer grid).
    B, N, F = 2, 8, 16          # batch, num_objs, num_img_feats
    S, E, H = 8, 16, 32         # seq_len, embed_dim, num_hid
    T, A = 50, 256              # num_tokens, num_answers

    key = jax.random.PRNGKey(0)
    k_v, k_q, k_p = jax.random.split(key, 3)

    v = jax.random.normal(k_v, (B, N, F), dtype=jnp.float32)
    q = jax.random.randint(k_q, (B, S), 0, T + 1, dtype=jnp.int32)
    params = init_params(k_p, T, E, H, F, A)

    out = vizwiznet_forward(params, v, q)
    out = jax.block_until_ready(out)
    assert out.shape == (B, A), out.shape

    ref = jax.block_until_ready(reference_forward(params, v, q))
    assert jnp.allclose(out, ref, atol=1e-2, rtol=1e-2), (
        "mismatch vs pure-JAX reference")

    print("KERNEL_OK")
</pallas_src>

<mosaic_0001>
module attributes {stable_mosaic.version = 11 : i64} {
  func.func @vizwiz_fused_kernel(%arg0: i32, %arg1: memref<64x16xf32, #tpu.memory_space<vmem>>, %arg2: memref<8x8x16xf32, #tpu.memory_space<vmem>>, %arg3: memref<16x96xf32, #tpu.memory_space<vmem>>, %arg4: memref<32x96xf32, #tpu.memory_space<vmem>>, %arg5: memref<1x96xf32, #tpu.memory_space<vmem>>, %arg6: memref<1x32xf32, #tpu.memory_space<vmem>>, %arg7: memref<16x32xf32, #tpu.memory_space<vmem>>, %arg8: memref<32x32xf32, #tpu.memory_space<vmem>>, %arg9: memref<1x32xf32, #tpu.memory_space<vmem>>, %arg10: memref<1x32xf32, #tpu.memory_space<vmem>>, %arg11: memref<32x32xf32, #tpu.memory_space<vmem>>, %arg12: memref<1x32xf32, #tpu.memory_space<vmem>>, %arg13: memref<16x32xf32, #tpu.memory_space<vmem>>, %arg14: memref<1x32xf32, #tpu.memory_space<vmem>>, %arg15: memref<32x64xf32, #tpu.memory_space<vmem>>, %arg16: memref<1x64xf32, #tpu.memory_space<vmem>>, %arg17: memref<64x128xf32, #tpu.memory_space<vmem>>, %arg18: memref<1x128xf32, #tpu.memory_space<vmem>>, %arg19: memref<8x128xf32, #tpu.memory_space<vmem>>, %arg20: memref<64x96xf32, #tpu.memory_space<vmem>>, %arg21: memref<8x64xf32, #tpu.memory_space<vmem>>) attributes {dimension_semantics = [#tpu.dimension_semantics<arbitrary>], iteration_bounds = array<i64: 2>, scalar_prefetch = 0 : i64, scratch_operands = 2 : i64, tpu.core_type = #tpu.core_type<tc>, window_params = [{pipeline_mode = #tpu.pipeline_mode<synchronous>, transform_indices = @transform_0, window_bounds = array<i64: 64, 16>}, {pipeline_mode = #tpu.pipeline_mode<synchronous>, transform_indices = @transform_1, window_bounds = array<i64: 8, 8, 16>}, {pipeline_mode = #tpu.pipeline_mode<synchronous>, transform_indices = @transform_2, window_bounds = array<i64: 16, 96>}, {pipeline_mode = #tpu.pipeline_mode<synchronous>, transform_indices = @transform_3, window_bounds = array<i64: 32, 96>}, {pipeline_mode = #tpu.pipeline_mode<synchronous>, transform_indices = @transform_4, window_bounds = array<i64: 1, 96>}, {pipeline_mode = #tpu.pipeline_mode<synchronous>, transform_indices = @transform_5, window_bounds = array<i64: 1, 32>}, {pipeline_mode = #tpu.pipeline_mode<synchronous>, transform_indices = @transform_6, window_bounds = array<i64: 16, 32>}, {pipeline_mode = #tpu.pipeline_mode<synchronous>, transform_indices = @transform_7, window_bounds = array<i64: 32, 32>}, {pipeline_mode = #tpu.pipeline_mode<synchronous>, transform_indices = @transform_8, window_bounds = array<i64: 1, 32>}, {pipeline_mode = #tpu.pipeline_mode<synchronous>, transform_indices = @transform_9, window_bounds = array<i64: 1, 32>}, {pipeline_mode = #tpu.pipeline_mode<synchronous>, transform_indices = @transform_10, window_bounds = array<i64: 32, 32>}, {pipeline_mode = #tpu.pipeline_mode<synchronous>, transform_indices = @transform_11, window_bounds = array<i64: 1, 32>}, {pipeline_mode = #tpu.pipeline_mode<synchronous>, transform_indices = @transform_12, window_bounds = array<i64: 16, 32>}, {pipeline_mode = #tpu.pipeline_mode<synchronous>, transform_indices = @transform_13, window_bounds = array<i64: 1, 32>}, {pipeline_mode = #tpu.pipeline_mode<synchronous>, transform_indices = @transform_14, window_bounds = array<i64: 32, 64>}, {pipeline_mode = #tpu.pipeline_mode<synchronous>, transform_indices = @transform_15, window_bounds = array<i64: 1, 64>}, {transform_indices = @transform_16, window_bounds = array<i64: 64, 128>}, {transform_indices = @transform_17, window_bounds = array<i64: 1, 128>}, {transform_indices = @transform_18, window_bounds = array<i64: 8, 128>}]} {
    %c0_i32 = arith.constant 0 : i32
    %0 = arith.cmpi eq, %arg0, %c0_i32 : i32
    %1 = arith.extui %0 : i1 to i32
    %c0_i32_0 = arith.constant 0 : i32
    %2 = arith.cmpi ne, %1, %c0_i32_0 : i32
    scf.if %2 {
      %c0_8 = arith.constant 0 : index
      %c0_9 = arith.constant 0 : index
      %10 = vector.load %arg1[%c0_8, %c0_9] : memref<64x16xf32, #tpu.memory_space<vmem>>, vector<64x16xf32>
      %c0_10 = arith.constant 0 : index
      %c0_11 = arith.constant 0 : index
      %11 = vector.load %arg3[%c0_10, %c0_11] : memref<16x96xf32, #tpu.memory_space<vmem>>, vector<16x96xf32>
      %cst_12 = arith.constant dense<0.000000e+00> : vector<64x96xf32>
      %12 = tpu.matmul %10, %11, %cst_12 {dimension_numbers = #tpu.dot_dimension_numbers<[1], [0], [0], [1], [0, 0, 1, 1], [], []>} : vector<64x16xf32>, vector<16x96xf32>, vector<64x96xf32> -> vector<64x96xf32>
      %c0_13 = arith.constant 0 : index
      %c0_14 = arith.constant 0 : index
      %13 = vector.load %arg5[%c0_13, %c0_14] : memref<1x96xf32, #tpu.memory_space<vmem>>, vector<1x96xf32>
      %14 = vector.broadcast %13 : vector<1x96xf32> to vector<64x96xf32>
      %15 = arith.addf %12, %14 : vector<64x96xf32>
      %c0_15 = arith.constant 0 : index
      %c0_16 = arith.constant 0 : index
      %16 = vector.load %arg20[%c0_15, %c0_16] : memref<64x96xf32, #tpu.memory_space<vmem>>, vector<64x96xf32>
      tpu.vector_store %arg20[%c0_15, %c0_16], %15 {strides = array<i32>} : memref<64x96xf32, #tpu.memory_space<vmem>>, vector<64x96xf32>,
      %c0_17 = arith.constant 0 : index
      %c0_18 = arith.constant 0 : index
      %17 = vector.load %arg6[%c0_17, %c0_18] : memref<1x32xf32, #tpu.memory_space<vmem>>, vector<1x32xf32>
      %18 = vector.shape_cast %17 : vector<1x32xf32> to vector<1x32xf32>
      %19 = vector.broadcast %18 : vector<1x32xf32> to vector<8x32xf32>
      %cst_19 = arith.constant 0.000000e+00 : f32
      %20 = vector.broadcast %cst_19 : f32 to vector<8x32xf32>
      %c0_i32_20 = arith.constant 0 : i32
      %c0_21 = arith.constant 0 : index
      %c0_22 = arith.constant 0 : index
      %21 = vector.load %arg4[%c0_21, %c0_22] : memref<32x96xf32, #tpu.memory_space<vmem>>, vector<32x96xf32>
      %cst_23 = arith.constant dense<0.000000e+00> : vector<8x96xf32>
      %22 = tpu.matmul %20, %21, %cst_23 {dimension_numbers = #tpu.dot_dimension_numbers<[1], [0], [0], [1], [0, 0, 1, 1], [], []>} : vector<8x32xf32>, vector<32x96xf32>, vector<8x96xf32> -> vector<8x96xf32>
      %c8_i32 = arith.constant 8 : i32
      %23 = arith.muli %c0_i32_20, %c8_i32 : i32
      %24 = arith.index_cast %23 : i32 to index
      %c0_24 = arith.constant 0 : index
      %25 = vector.load %arg20[%24, %c0_24] : memref<64x96xf32, #tpu.memory_space<vmem>>, vector<8x96xf32>
      %26 = vector.extract_strided_slice %25 {offsets = [0, 0], sizes = [8, 32], strides = [1, 1]} : vector<8x96xf32> to vector<8x32xf32>
      %27 = vector.extract_strided_slice %22 {offsets = [0, 0], sizes = [8, 32], strides = [1, 1]} : vector<8x96xf32> to vector<8x32xf32>
      %28 = arith.addf %26, %27 : vector<8x32xf32>
      %29 = arith.negf %28 : vector<8x32xf32>
      %30 = math.exp %29 : vector<8x32xf32>
      %cst_25 = arith.constant 1.000000e+00 : f32
      %31 = vector.broadcast %cst_25 : f32 to vector<8x32xf32>
      %32 = arith.addf %31, %30 : vector<8x32xf32>
      %33 = arith.divf %31, %32 : vector<8x32xf32>
      %34 = vector.extract_strided_slice %25 {offsets = [0, 32], sizes = [8, 32], strides = [1, 1]} : vector<8x96xf32> to vector<8x32xf32>
      %35 = vector.extract_strided_slice %22 {offsets = [0, 32], sizes = [8, 32], strides = [1, 1]} : vector<8x96xf32> to vector<8x32xf32>
      %36 = arith.addf %34, %35 : vector<8x32xf32>
      %37 = arith.negf %36 : vector<8x32xf32>
      %38 = math.exp %37 : vector<8x32xf32>
      %cst_26 = arith.constant 1.000000e+00 : f32
      %39 = vector.broadcast %cst_26 : f32 to vector<8x32xf32>
      %40 = arith.addf %39, %38 : vector<8x32xf32>
      %41 = arith.divf %39, %40 : vector<8x32xf32>
      %42 = vector.extract_strided_slice %25 {offsets = [0, 64], sizes = [8, 32], strides = [1, 1]} : vector<8x96xf32> to vector<8x32xf32>
      %43 = vector.extract_strided_slice %22 {offsets = [0, 64], sizes = [8, 32], strides = [1, 1]} : vector<8x96xf32> to vector<8x32xf32>
      %44 = arith.addf %43, %19 : vector<8x32xf32>
      %45 = arith.mulf %33, %44 : vector<8x32xf32>
      %46 = arith.addf %42, %45 : vector<8x32xf32>
      %47 = math.tanh %46 : vector<8x32xf32>
      %cst_27 = arith.constant 1.000000e+00 : f32
      %48 = vector.broadcast %cst_27 : f32 to vector<8x32xf32>
      %49 = arith.subf %48, %41 : vector<8x32xf32>
      %50 = arith.mulf %49, %47 : vector<8x32xf32>
      %51 = arith.mulf %41, %20 : vector<8x32xf32>
      %52 = arith.addf %50, %51 : vector<8x32xf32>
      %c1_i32 = arith.constant 1 : i32
      %c0_28 = arith.constant 0 : index
      %c0_29 = arith.constant 0 : index
      %53 = vector.load %arg4[%c0_28, %c0_29] : memref<32x96xf32, #tpu.memory_space<vmem>>, vector<32x96xf32>
      %cst_30 = arith.constant dense<0.000000e+00> : vector<8x96xf32>
      %54 = tpu.matmul %52, %53, %cst_30 {dimension_numbers = #tpu.dot_dimension_numbers<[1], [0], [0], [1], [0, 0, 1, 1], [], []>} : vector<8x32xf32>, vector<32x96xf32>, vector<8x96xf32> -> vector<8x96xf32>
      %c8_i32_31 = arith.constant 8 : i32
      %55 = arith.muli %c1_i32, %c8_i32_31 : i32
      %56 = arith.index_cast %55 : i32 to index
      %c0_32 = arith.constant 0 : index
      %57 = vector.load %arg20[%56, %c0_32] : memref<64x96xf32, #tpu.memory_space<vmem>>, vector<8x96xf32>
      %58 = vector.extract_strided_slice %57 {offsets = [0, 0], sizes = [8, 32], strides = [1, 1]} : vector<8x96xf32> to vector<8x32xf32>
      %59 = vector.extract_strided_slice %54 {offsets = [0, 0], sizes = [8, 32], strides = [1, 1]} : vector<8x96xf32> to vector<8x32xf32>
      %60 = arith.addf %58, %59 : vector<8x32xf32>
      %61 = arith.negf %60 : vector<8x32xf32>
      %62 = math.exp %61 : vector<8x32xf32>
      %cst_33 = arith.constant 1.000000e+00 : f32
      %63 = vector.broadcast %cst_33 : f32 to vector<8x32xf32>
      %64 = arith.addf %63, %62 : vector<8x32xf32>
      %65 = arith.divf %63, %64 : vector<8x32xf32>
      %66 = vector.extract_strided_slice %57 {offsets = [0, 32], sizes = [8, 32], strides = [1, 1]} : vector<8x96xf32> to vector<8x32xf32>
      %67 = vector.extract_strided_slice %54 {offsets = [0, 32], sizes = [8, 32], strides = [1, 1]} : vector<8x96xf32> to vector<8x32xf32>
      %68 = arith.addf %66, %67 : vector<8x32xf32>
      %69 = arith.negf %68 : vector<8x32xf32>
      %70 = math.exp %69 : vector<8x32xf32>
      %cst_34 = arith.constant 1.000000e+00 : f32
      %71 = vector.broadcast %cst_34 : f32 to vector<8x32xf32>
      %72 = arith.addf %71, %70 : vector<8x32xf32>
      %73 = arith.divf %71, %72 : vector<8x32xf32>
      %74 = vector.extract_strided_slice %57 {offsets = [0, 64], sizes = [8, 32], strides = [1, 1]} : vector<8x96xf32> to vector<8x32xf32>
      %75 = vector.extract_strided_slice %54 {offsets = [0, 64], sizes = [8, 32], strides = [1, 1]} : vector<8x96xf32> to vector<8x32xf32>
      %76 = arith.addf %75, %19 : vector<8x32xf32>
      %77 = arith.mulf %65, %76 : vector<8x32xf32>
      %78 = arith.addf %74, %77 : vector<8x32xf32>
      %79 = math.tanh %78 : vector<8x32xf32>
      %cst_35 = arith.constant 1.000000e+00 : f32
      %80 = vector.broadcast %cst_35 : f32 to vector<8x32xf32>
      %81 = arith.subf %80, %73 : vector<8x32xf32>
      %82 = arith.mulf %81, %79 : vector<8x32xf32>
      %83 = arith.mulf %73, %52 : vector<8x32xf32>
      %84 = arith.addf %82, %83 : vector<8x32xf32>
      %c2_i32 = arith.constant 2 : i32
      %c0_36 = arith.constant 0 : index
      %c0_37 = arith.constant 0 : index
      %85 = vector.load %arg4[%c0_36, %c0_37] : memref<32x96xf32, #tpu.memory_space<vmem>>, vector<32x96xf32>
      %cst_38 = arith.constant dense<0.000000e+00> : vector<8x96xf32>
      %86 = tpu.matmul %84, %85, %cst_38 {dimension_numbers = #tpu.dot_dimension_numbers<[1], [0], [0], [1], [0, 0, 1, 1], [], []>} : vector<8x32xf32>, vector<32x96xf32>, vector<8x96xf32> -> vector<8x96xf32>
      %c8_i32_39 = arith.constant 8 : i32
      %87 = arith.muli %c2_i32, %c8_i32_39 : i32
      %88 = arith.index_cast %87 : i32 to index
      %c0_40 = arith.constant 0 : index
      %89 = vector.load %arg20[%88, %c0_40] : memref<64x96xf32, #tpu.memory_space<vmem>>, vector<8x96xf32>
      %90 = vector.extract_strided_slice %89 {offsets = [0, 0], sizes = [8, 32], strides = [1, 1]} : vector<8x96xf32> to vector<8x32xf32>
      %91 = vector.extract_strided_slice %86 {offsets = [0, 0], sizes = [8, 32], strides = [1, 1]} : vector<8x96xf32> to vector<8x32xf32>
      %92 = arith.addf %90, %91 : vector<8x32xf32>
      %93 = arith.negf %92 : vector<8x32xf32>
      %94 = math.exp %93 : vector<8x32xf32>
      %cst_41 = arith.constant 1.000000e+00 : f32
      %95 = vector.broadcast %cst_41 : f32 to vector<8x32xf32>
      %96 = arith.addf %95, %94 : vector<8x32xf32>
      %97 = arith.divf %95, %96 : vector<8x32xf32>
      %98 = vector.extract_strided_slice %89 {offsets = [0, 32], sizes = [8, 32], strides = [1, 1]} : vector<8x96xf32> to vector<8x32xf32>
      %99 = vector.extract_strided_slice %86 {offsets = [0, 32], sizes = [8, 32], strides = [1, 1]} : vector<8x96xf32> to vector<8x32xf32>
      %100 = arith.addf %98, %99 : vector<8x32xf32>
      %101 = arith.negf %100 : vector<8x32xf32>
      %102 = math.exp %101 : vector<8x32xf32>
      %cst_42 = arith.constant 1.000000e+00 : f32
      %103 = vector.broadcast %cst_42 : f32 to vector<8x32xf32>
      %104 = arith.addf %103, %102 : vector<8x32xf32>
      %105 = arith.divf %103, %104 : vector<8x32xf32>
      %106 = vector.extract_strided_slice %89 {offsets = [0, 64], sizes = [8, 32], strides = [1, 1]} : vector<8x96xf32> to vector<8x32xf32>
      %107 = vector.extract_strided_slice %86 {offsets = [0, 64], sizes = [8, 32], strides = [1, 1]} : vector<8x96xf32> to vector<8x32xf32>
      %108 = arith.addf %107, %19 : vector<8x32xf32>
      %109 = arith.mulf %97, %108 : vector<8x32xf32>
      %110 = arith.addf %106, %109 : vector<8x32xf32>
      %111 = math.tanh %110 : vector<8x32xf32>
      %cst_43 = arith.constant 1.000000e+00 : f32
      %112 = vector.broadcast %cst_43 : f32 to vector<8x32xf32>
      %113 = arith.subf %112, %105 : vector<8x32xf32>
      %114 = arith.mulf %113, %111 : vector<8x32xf32>
      %115 = arith.mulf %105, %84 : vector<8x32xf32>
      %116 = arith.addf %114, %115 : vector<8x32xf32>
      %c3_i32 = arith.constant 3 : i32
      %c0_44 = arith.constant 0 : index
      %c0_45 = arith.constant 0 : index
      %117 = vector.load %arg4[%c0_44, %c0_45] : memref<32x96xf32, #tpu.memory_space<vmem>>, vector<32x96xf32>
      %cst_46 = arith.constant dense<0.000000e+00> : vector<8x96xf32>
      %118 = tpu.matmul %116, %117, %cst_46 {dimension_numbers = #tpu.dot_dimension_numbers<[1], [0], [0], [1], [0, 0, 1, 1], [], []>} : vector<8x32xf32>, vector<32x96xf32>, vector<8x96xf32> -> vector<8x96xf32>
      %c8_i32_47 = arith.constant 8 : i32
      %119 = arith.muli %c3_i32, %c8_i32_47 : i32
      %120 = arith.index_cast %119 : i32 to index
      %c0_48 = arith.constant 0 : index
      %121 = vector.load %arg20[%120, %c0_48] : memref<64x96xf32, #tpu.memory_space<vmem>>, vector<8x96xf32>
      %122 = vector.extract_strided_slice %121 {offsets = [0, 0], sizes = [8, 32], strides = [1, 1]} : vector<8x96xf32> to vector<8x32xf32>
      %123 = vector.extract_strided_slice %118 {offsets = [0, 0], sizes = [8, 32], strides = [1, 1]} : vector<8x96xf32> to vector<8x32xf32>
      %124 = arith.addf %122, %123 : vector<8x32xf32>
      %125 = arith.negf %124 : vector<8x32xf32>
      %126 = math.exp %125 : vector<8x32xf32>
      %cst_49 = arith.constant 1.000000e+00 : f32
      %127 = vector.broadcast %cst_49 : f32 to vector<8x32xf32>
      %128 = arith.addf %127, %126 : vector<8x32xf32>
      %129 = arith.divf %127, %128 : vector<8x32xf32>
      %130 = vector.extract_strided_slice %121 {offsets = [0, 32], sizes = [8, 32], strides = [1, 1]} : vector<8x96xf32> to vector<8x32xf32>
      %131 = vector.extract_strided_slice %118 {offsets = [0, 32], sizes = [8, 32], strides = [1, 1]} : vector<8x96xf32> to vector<8x32xf32>
      %132 = arith.addf %130, %131 : vector<8x32xf32>
      %133 = arith.negf %132 : vector<8x32xf32>
      %134 = math.exp %133 : vector<8x32xf32>
      %cst_50 = arith.constant 1.000000e+00 : f32
      %135 = vector.broadcast %cst_50 : f32 to vector<8x32xf32>
      %136 = arith.addf %135, %134 : vector<8x32xf32>
      %137 = arith.divf %135, %136 : vector<8x32xf32>
      %138 = vector.extract_strided_slice %121 {offsets = [0, 64], sizes = [8, 32], strides = [1, 1]} : vector<8x96xf32> to vector<8x32xf32>
      %139 = vector.extract_strided_slice %118 {offsets = [0, 64], sizes = [8, 32], strides = [1, 1]} : vector<8x96xf32> to vector<8x32xf32>
      %140 = arith.addf %139, %19 : vector<8x32xf32>
      %141 = arith.mulf %129, %140 : vector<8x32xf32>
      %142 = arith.addf %138, %141 : vector<8x32xf32>
      %143 = math.tanh %142 : vector<8x32xf32>
      %cst_51 = arith.constant 1.000000e+00 : f32
      %144 = vector.broadcast %cst_51 : f32 to vector<8x32xf32>
      %145 = arith.subf %144, %137 : vector<8x32xf32>
      %146 = arith.mulf %145, %143 : vector<8x32xf32>
      %147 = arith.mulf %137, %116 : vector<8x32xf32>
      %148 = arith.addf %146, %147 : vector<8x32xf32>
      %c4_i32 = arith.constant 4 : i32
      %c0_52 = arith.constant 0 : index
      %c0_53 = arith.constant 0 : index
      %149 = vector.load %arg4[%c0_52, %c0_53] : memref<32x96xf32, #tpu.memory_space<vmem>>, vector<32x96xf32>
      %cst_54 = arith.constant dense<0.000000e+00> : vector<8x96xf32>
      %150 = tpu.matmul %148, %149, %cst_54 {dimension_numbers = #tpu.dot_dimension_numbers<[1], [0], [0], [1], [0, 0, 1, 1], [], []>} : vector<8x32xf32>, vector<32x96xf32>, vector<8x96xf32> -> vector<8x96xf32>
      %c8_i32_55 = arith.constant 8 : i32
      %151 = arith.muli %c4_i32, %c8_i32_55 : i32
      %152 = arith.index_cast %151 : i32 to index
      %c0_56 = arith.constant 0 : index
      %153 = vector.load %arg20[%152, %c0_56] : memref<64x96xf32, #tpu.memory_space<vmem>>, vector<8x96xf32>
      %154 = vector.extract_strided_slice %153 {offsets = [0, 0], sizes = [8, 32], strides = [1, 1]} : vector<8x96xf32> to vector<8x32xf32>
      %155 = vector.extract_strided_slice %150 {offsets = [0, 0], sizes = [8, 32], strides = [1, 1]} : vector<8x96xf32> to vector<8x32xf32>
      %156 = arith.addf %154, %155 : vector<8x32xf32>
      %157 = arith.negf %156 : vector<8x32xf32>
      %158 = math.exp %157 : vector<8x32xf32>
      %cst_57 = arith.constant 1.000000e+00 : f32
      %159 = vector.broadcast %cst_57 : f32 to vector<8x32xf32>
      %160 = arith.addf %159, %158 : vector<8x32xf32>
      %161 = arith.divf %159, %160 : vector<8x32xf32>
      %162 = vector.extract_strided_slice %153 {offsets = [0, 32], sizes = [8, 32], strides = [1, 1]} : vector<8x96xf32> to vector<8x32xf32>
      %163 = vector.extract_strided_slice %150 {offsets = [0, 32], sizes = [8, 32], strides = [1, 1]} : vector<8x96xf32> to vector<8x32xf32>
      %164 = arith.addf %162, %163 : vector<8x32xf32>
      %165 = arith.negf %164 : vector<8x32xf32>
      %166 = math.exp %165 : vector<8x32xf32>
      %cst_58 = arith.constant 1.000000e+00 : f32
      %167 = vector.broadcast %cst_58 : f32 to vector<8x32xf32>
      %168 = arith.addf %167, %166 : vector<8x32xf32>
      %169 = arith.divf %167, %168 : vector<8x32xf32>
      %170 = vector.extract_strided_slice %153 {offsets = [0, 64], sizes = [8, 32], strides = [1, 1]} : vector<8x96xf32> to vector<8x32xf32>
      %171 = vector.extract_strided_slice %150 {offsets = [0, 64], sizes = [8, 32], strides = [1, 1]} : vector<8x96xf32> to vector<8x32xf32>
      %172 = arith.addf %171, %19 : vector<8x32xf32>
      %173 = arith.mulf %161, %172 : vector<8x32xf32>
      %174 = arith.addf %170, %173 : vector<8x32xf32>
      %175 = math.tanh %174 : vector<8x32xf32>
      %cst_59 = arith.constant 1.000000e+00 : f32
      %176 = vector.broadcast %cst_59 : f32 to vector<8x32xf32>
      %177 = arith.subf %176, %169 : vector<8x32xf32>
      %178 = arith.mulf %177, %175 : vector<8x32xf32>
      %179 = arith.mulf %169, %148 : vector<8x32xf32>
      %180 = arith.addf %178, %179 : vector<8x32xf32>
      %c5_i32 = arith.constant 5 : i32
      %c0_60 = arith.constant 0 : index
      %c0_61 = arith.constant 0 : index
      %181 = vector.load %arg4[%c0_60, %c0_61] : memref<32x96xf32, #tpu.memory_space<vmem>>, vector<32x96xf32>
      %cst_62 = arith.constant dense<0.000000e+00> : vector<8x96xf32>
      %182 = tpu.matmul %180, %181, %cst_62 {dimension_numbers = #tpu.dot_dimension_numbers<[1], [0], [0], [1], [0, 0, 1, 1], [], []>} : vector<8x32xf32>, vector<32x96xf32>, vector<8x96xf32> -> vector<8x96xf32>
      %c8_i32_63 = arith.constant 8 : i32
      %183 = arith.muli %c5_i32, %c8_i32_63 : i32
      %184 = arith.index_cast %183 : i32 to index
      %c0_64 = arith.constant 0 : index
      %185 = vector.load %arg20[%184, %c0_64] : memref<64x96xf32, #tpu.memory_space<vmem>>, vector<8x96xf32>
      %186 = vector.extract_strided_slice %185 {offsets = [0, 0], sizes = [8, 32], strides = [1, 1]} : vector<8x96xf32> to vector<8x32xf32>
      %187 = vector.extract_strided_slice %182 {offsets = [0, 0], sizes = [8, 32], strides = [1, 1]} : vector<8x96xf32> to vector<8x32xf32>
      %188 = arith.addf %186, %187 : vector<8x32xf32>
      %189 = arith.negf %188 : vector<8x32xf32>
      %190 = math.exp %189 : vector<8x32xf32>
      %cst_65 = arith.constant 1.000000e+00 : f32
      %191 = vector.broadcast %cst_65 : f32 to vector<8x32xf32>
      %192 = arith.addf %191, %190 : vector<8x32xf32>
      %193 = arith.divf %191, %192 : vector<8x32xf32>
      %194 = vector.extract_strided_slice %185 {offsets = [0, 32], sizes = [8, 32], strides = [1, 1]} : vector<8x96xf32> to vector<8x32xf32>
      %195 = vector.extract_strided_slice %182 {offsets = [0, 32], sizes = [8, 32], strides = [1, 1]} : vector<8x96xf32> to vector<8x32xf32>
      %196 = arith.addf %194, %195 : vector<8x32xf32>
      %197 = arith.negf %196 : vector<8x32xf32>
      %198 = math.exp %197 : vector<8x32xf32>
      %cst_66 = arith.constant 1.000000e+00 : f32
      %199 = vector.broadcast %cst_66 : f32 to vector<8x32xf32>
      %200 = arith.addf %199, %198 : vector<8x32xf32>
      %201 = arith.divf %199, %200 : vector<8x32xf32>
      %202 = vector.extract_strided_slice %185 {offsets = [0, 64], sizes = [8, 32], strides = [1, 1]} : vector<8x96xf32> to vector<8x32xf32>
      %203 = vector.extract_strided_slice %182 {offsets = [0, 64], sizes = [8, 32], strides = [1, 1]} : vector<8x96xf32> to vector<8x32xf32>
      %204 = arith.addf %203, %19 : vector<8x32xf32>
      %205 = arith.mulf %193, %204 : vector<8x32xf32>
      %206 = arith.addf %202, %205 : vector<8x32xf32>
      %207 = math.tanh %206 : vector<8x32xf32>
      %cst_67 = arith.constant 1.000000e+00 : f32
      %208 = vector.broadcast %cst_67 : f32 to vector<8x32xf32>
      %209 = arith.subf %208, %201 : vector<8x32xf32>
      %210 = arith.mulf %209, %207 : vector<8x32xf32>
      %211 = arith.mulf %201, %180 : vector<8x32xf32>
      %212 = arith.addf %210, %211 : vector<8x32xf32>
      %c6_i32 = arith.constant 6 : i32
      %c0_68 = arith.constant 0 : index
      %c0_69 = arith.constant 0 : index
      %213 = vector.load %arg4[%c0_68, %c0_69] : memref<32x96xf32, #tpu.memory_space<vmem>>, vector<32x96xf32>
      %cst_70 = arith.constant dense<0.000000e+00> : vector<8x96xf32>
      %214 = tpu.matmul %212, %213, %cst_70 {dimension_numbers = #tpu.dot_dimension_numbers<[1], [0], [0], [1], [0, 0, 1, 1], [], []>} : vector<8x32xf32>, vector<32x96xf32>, vector<8x96xf32> -> vector<8x96xf32>
      %c8_i32_71 = arith.constant 8 : i32
      %215 = arith.muli %c6_i32, %c8_i32_71 : i32
      %216 = arith.index_cast %215 : i32 to index
      %c0_72 = arith.constant 0 : index
      %217 = vector.load %arg20[%216, %c0_72] : memref<64x96xf32, #tpu.memory_space<vmem>>, vector<8x96xf32>
      %218 = vector.extract_strided_slice %217 {offsets = [0, 0], sizes = [8, 32], strides = [1, 1]} : vector<8x96xf32> to vector<8x32xf32>
      %219 = vector.extract_strided_slice %214 {offsets = [0, 0], sizes = [8, 32], strides = [1, 1]} : vector<8x96xf32> to vector<8x32xf32>
      %220 = arith.addf %218, %219 : vector<8x32xf32>
      %221 = arith.negf %220 : vector<8x32xf32>
      %222 = math.exp %221 : vector<8x32xf32>
      %cst_73 = arith.constant 1.000000e+00 : f32
      %223 = vector.broadcast %cst_73 : f32 to vector<8x32xf32>
      %224 = arith.addf %223, %222 : vector<8x32xf32>
      %225 = arith.divf %223, %224 : vector<8x32xf32>
      %226 = vector.extract_strided_slice %217 {offsets = [0, 32], sizes = [8, 32], strides = [1, 1]} : vector<8x96xf32> to vector<8x32xf32>
      %227 = vector.extract_strided_slice %214 {offsets = [0, 32], sizes = [8, 32], strides = [1, 1]} : vector<8x96xf32> to vector<8x32xf32>
      %228 = arith.addf %226, %227 : vector<8x32xf32>
      %229 = arith.negf %228 : vector<8x32xf32>
      %230 = math.exp %229 : vector<8x32xf32>
      %cst_74 = arith.constant 1.000000e+00 : f32
      %231 = vector.broadcast %cst_74 : f32 to vector<8x32xf32>
      %232 = arith.addf %231, %230 : vector<8x32xf32>
      %233 = arith.divf %231, %232 : vector<8x32xf32>
      %234 = vector.extract_strided_slice %217 {offsets = [0, 64], sizes = [8, 32], strides = [1, 1]} : vector<8x96xf32> to vector<8x32xf32>
      %235 = vector.extract_strided_slice %214 {offsets = [0, 64], sizes = [8, 32], strides = [1, 1]} : vector<8x96xf32> to vector<8x32xf32>
      %236 = arith.addf %235, %19 : vector<8x32xf32>
      %237 = arith.mulf %225, %236 : vector<8x32xf32>
      %238 = arith.addf %234, %237 : vector<8x32xf32>
      %239 = math.tanh %238 : vector<8x32xf32>
      %cst_75 = arith.constant 1.000000e+00 : f32
      %240 = vector.broadcast %cst_75 : f32 to vector<8x32xf32>
      %241 = arith.subf %240, %233 : vector<8x32xf32>
      %242 = arith.mulf %241, %239 : vector<8x32xf32>
      %243 = arith.mulf %233, %212 : vector<8x32xf32>
      %244 = arith.addf %242, %243 : vector<8x32xf32>
      %c7_i32 = arith.constant 7 : i32
      %c0_76 = arith.constant 0 : index
      %c0_77 = arith.constant 0 : index
      %245 = vector.load %arg4[%c0_76, %c0_77] : memref<32x96xf32, #tpu.memory_space<vmem>>, vector<32x96xf32>
      %cst_78 = arith.constant dense<0.000000e+00> : vector<8x96xf32>
      %246 = tpu.matmul %244, %245, %cst_78 {dimension_numbers = #tpu.dot_dimension_numbers<[1], [0], [0], [1], [0, 0, 1, 1], [], []>} : vector<8x32xf32>, vector<32x96xf32>, vector<8x96xf32> -> vector<8x96xf32>
      %c8_i32_79 = arith.constant 8 : i32
      %247 = arith.muli %c7_i32, %c8_i32_79 : i32
      %248 = arith.index_cast %247 : i32 to index
      %c0_80 = arith.constant 0 : index
      %249 = vector.load %arg20[%248, %c0_80] : memref<64x96xf32, #tpu.memory_space<vmem>>, vector<8x96xf32>
      %250 = vector.extract_strided_slice %249 {offsets = [0, 0], sizes = [8, 32], strides = [1, 1]} : vector<8x96xf32> to vector<8x32xf32>
      %251 = vector.extract_strided_slice %246 {offsets = [0, 0], sizes = [8, 32], strides = [1, 1]} : vector<8x96xf32> to vector<8x32xf32>
      %252 = arith.addf %250, %251 : vector<8x32xf32>
      %253 = arith.negf %252 : vector<8x32xf32>
      %254 = math.exp %253 : vector<8x32xf32>
      %cst_81 = arith.constant 1.000000e+00 : f32
      %255 = vector.broadcast %cst_81 : f32 to vector<8x32xf32>
      %256 = arith.addf %255, %254 : vector<8x32xf32>
      %257 = arith.divf %255, %256 : vector<8x32xf32>
      %258 = vector.extract_strided_slice %249 {offsets = [0, 32], sizes = [8, 32], strides = [1, 1]} : vector<8x96xf32> to vector<8x32xf32>
      %259 = vector.extract_strided_slice %246 {offsets = [0, 32], sizes = [8, 32], strides = [1, 1]} : vector<8x96xf32> to vector<8x32xf32>
      %260 = arith.addf %258, %259 : vector<8x32xf32>
      %261 = arith.negf %260 : vector<8x32xf32>
      %262 = math.exp %261 : vector<8x32xf32>
      %cst_82 = arith.constant 1.000000e+00 : f32
      %263 = vector.broadcast %cst_82 : f32 to vector<8x32xf32>
      %264 = arith.addf %263, %262 : vector<8x32xf32>
      %265 = arith.divf %263, %264 : vector<8x32xf32>
      %266 = vector.extract_strided_slice %249 {offsets = [0, 64], sizes = [8, 32], strides = [1, 1]} : vector<8x96xf32> to vector<8x32xf32>
      %267 = vector.extract_strided_slice %246 {offsets = [0, 64], sizes = [8, 32], strides = [1, 1]} : vector<8x96xf32> to vector<8x32xf32>
      %268 = arith.addf %267, %19 : vector<8x32xf32>
      %269 = arith.mulf %257, %268 : vector<8x32xf32>
      %270 = arith.addf %266, %269 : vector<8x32xf32>
      %271 = math.tanh %270 : vector<8x32xf32>
      %cst_83 = arith.constant 1.000000e+00 : f32
      %272 = vector.broadcast %cst_83 : f32 to vector<8x32xf32>
      %273 = arith.subf %272, %265 : vector<8x32xf32>
      %274 = arith.mulf %273, %271 : vector<8x32xf32>
      %275 = arith.mulf %265, %244 : vector<8x32xf32>
      %276 = arith.addf %274, %275 : vector<8x32xf32>
      %c8_i32_84 = arith.constant 8 : i32
      %c0_85 = arith.constant 0 : index
      %c0_86 = arith.constant 0 : index
      %c0_87 = arith.constant 0 : index
      %277 = vector.load %arg2[%c0_85, %c0_86, %c0_87] : memref<8x8x16xf32, #tpu.memory_space<vmem>>, vector<8x8x16xf32>
      %278 = vector.shape_cast %277 : vector<8x8x16xf32> to vector<64x16xf32>
      %c0_88 = arith.constant 0 : index
      %c0_89 = arith.constant 0 : index
      %279 = vector.load %arg7[%c0_88, %c0_89] : memref<16x32xf32, #tpu.memory_space<vmem>>, vector<16x32xf32>
      %cst_90 = arith.constant dense<0.000000e+00> : vector<64x32xf32>
      %280 = tpu.matmul %278, %279, %cst_90 {dimension_numbers = #tpu.dot_dimension_numbers<[1], [0], [0], [1], [0, 0, 1, 1], [], []>} : vector<64x16xf32>, vector<16x32xf32>, vector<64x32xf32> -> vector<64x32xf32>
      %281 = vector.shape_cast %280 : vector<64x32xf32> to vector<8x8x32xf32>
      %c0_91 = arith.constant 0 : index
      %c0_92 = arith.constant 0 : index
      %282 = vector.load %arg8[%c0_91, %c0_92] : memref<32x32xf32, #tpu.memory_space<vmem>>, vector<32x32xf32>
      %cst_93 = arith.constant dense<0.000000e+00> : vector<8x32xf32>
      %283 = tpu.matmul %276, %282, %cst_93 {dimension_numbers = #tpu.dot_dimension_numbers<[1], [0], [0], [1], [0, 0, 1, 1], [], []>} : vector<8x32xf32>, vector<32x32xf32>, vector<8x32xf32> -> vector<8x32xf32>
      %284 = vector.shape_cast %283 : vector<8x32xf32> to vector<8x1x32xf32>
      %285 = vector.broadcast %284 : vector<8x1x32xf32> to vector<8x8x32xf32>
      %286 = arith.addf %281, %285 : vector<8x8x32xf32>
      %c0_94 = arith.constant 0 : index
      %c0_95 = arith.constant 0 : index
      %287 = vector.load %arg9[%c0_94, %c0_95] : memref<1x32xf32, #tpu.memory_space<vmem>>, vector<1x32xf32>
      %288 = vector.shape_cast %287 : vector<1x32xf32> to vector<1x1x32xf32>
      %289 = vector.broadcast %288 : vector<1x1x32xf32> to vector<8x8x32xf32>
      %290 = arith.addf %286, %289 : vector<8x8x32xf32>
      %cst_96 = arith.constant 0.000000e+00 : f32
      %291 = vector.broadcast %cst_96 : f32 to vector<8x8x32xf32>
      %292 = arith.maximumf %290, %291 : vector<8x8x32xf32>
      %c0_97 = arith.constant 0 : index
      %c0_98 = arith.constant 0 : index
      %293 = vector.load %arg10[%c0_97, %c0_98] : memref<1x32xf32, #tpu.memory_space<vmem>>, vector<1x32xf32>
      %294 = vector.shape_cast %293 : vector<1x32xf32> to vector<1x1x32xf32>
      %295 = vector.broadcast %294 : vector<1x1x32xf32> to vector<8x8x32xf32>
      %296 = arith.mulf %292, %295 : vector<8x8x32xf32>
      %cst_99 = arith.constant dense<0.000000e+00> : vector<8x8xf32>
      %297 = vector.multi_reduction <add>, %296, %cst_99 [2] : vector<8x8x32xf32> to vector<8x8xf32>
      %cst_100 = arith.constant dense<0xFF800000> : vector<8xf32>
      %298 = vector.multi_reduction <maximumf>, %297, %cst_100 [1] : vector<8x8xf32> to vector<8xf32>
      %299 = vector.shape_cast %298 : vector<8xf32> to vector<8x1xf32>
      %300 = vector.broadcast %299 : vector<8x1xf32> to vector<8x8xf32>
      %301 = arith.subf %297, %300 : vector<8x8xf32>
      %302 = math.exp %301 : vector<8x8xf32>
      %cst_101 = arith.constant dense<0.000000e+00> : vector<8xf32>
      %303 = vector.multi_reduction <add>, %302, %cst_101 [1] : vector<8x8xf32> to vector<8xf32>
      %304 = vector.shape_cast %303 : vector<8xf32> to vector<8x1xf32>
      %305 = vector.broadcast %304 : vector<8x1xf32> to vector<8x8xf32>
      %306 = arith.divf %302, %305 : vector<8x8xf32>
      %307 = vector.shape_cast %306 : vector<8x8xf32> to vector<8x1x8xf32>
      "tpu.trace_start"() <{level = 10 : i32, message = "bqn,bnf->bqf"}> : () -> ()
      %cst_102 = arith.constant dense<0.000000e+00> : vector<8x1x16xf32>
      %308 = tpu.matmul %307, %277, %cst_102 {dimension_numbers = #tpu.dot_dimension_numbers<[2], [1], [1], [2], [0, 0, 0, 1, 1, 2], [0], [0]>} : vector<8x1x8xf32>, vector<8x8x16xf32>, vector<8x1x16xf32> -> vector<8x1x16xf32>
      "tpu.trace_stop"() : () -> ()
      %309 = vector.shape_cast %308 : vector<8x1x16xf32> to vector<8x16xf32>
      %c0_103 = arith.constant 0 : index
      %c0_104 = arith.constant 0 : index
      %310 = vector.load %arg11[%c0_103, %c0_104] : memref<32x32xf32, #tpu.memory_space<vmem>>, vector<32x32xf32>
      %cst_105 = arith.constant dense<0.000000e+00> : vector<8x32xf32>
      %311 = tpu.matmul %276, %310, %cst_105 {dimension_numbers = #tpu.dot_dimension_numbers<[1], [0], [0], [1], [0, 0, 1, 1], [], []>} : vector<8x32xf32>, vector<32x32xf32>, vector<8x32xf32> -> vector<8x32xf32>
      %c0_106 = arith.constant 0 : index
      %c0_107 = arith.constant 0 : index
      %312 = vector.load %arg12[%c0_106, %c0_107] : memref<1x32xf32, #tpu.memory_space<vmem>>, vector<1x32xf32>
      %313 = vector.broadcast %312 : vector<1x32xf32> to vector<8x32xf32>
      %314 = arith.addf %311, %313 : vector<8x32xf32>
      %cst_108 = arith.constant 0.000000e+00 : f32
      %315 = vector.broadcast %cst_108 : f32 to vector<8x32xf32>
      %316 = arith.maximumf %314, %315 : vector<8x32xf32>
      %c0_109 = arith.constant 0 : index
      %c0_110 = arith.constant 0 : index
      %317 = vector.load %arg13[%c0_109, %c0_110] : memref<16x32xf32, #tpu.memory_space<vmem>>, vector<16x32xf32>
      %cst_111 = arith.constant dense<0.000000e+00> : vector<8x32xf32>
      %318 = tpu.matmul %309, %317, %cst_111 {dimension_numbers = #tpu.dot_dimension_numbers<[1], [0], [0], [1], [0, 0, 1, 1], [], []>} : vector<8x16xf32>, vector<16x32xf32>, vector<8x32xf32> -> vector<8x32xf32>
      %c0_112 = arith.constant 0 : index
      %c0_113 = arith.constant 0 : index
      %319 = vector.load %arg14[%c0_112, %c0_113] : memref<1x32xf32, #tpu.memory_space<vmem>>, vector<1x32xf32>
      %320 = vector.broadcast %319 : vector<1x32xf32> to vector<8x32xf32>
      %321 = arith.addf %318, %320 : vector<8x32xf32>
      %cst_114 = arith.constant 0.000000e+00 : f32
      %322 = vector.broadcast %cst_114 : f32 to vector<8x32xf32>
      %323 = arith.maximumf %321, %322 : vector<8x32xf32>
      %324 = arith.mulf %316, %323 : vector<8x32xf32>
      %c0_115 = arith.constant 0 : index
      %c0_116 = arith.constant 0 : index
      %325 = vector.load %arg15[%c0_115, %c0_116] : memref<32x64xf32, #tpu.memory_space<vmem>>, vector<32x64xf32>
      %cst_117 = arith.constant dense<0.000000e+00> : vector<8x64xf32>
      %326 = tpu.matmul %324, %325, %cst_117 {dimension_numbers = #tpu.dot_dimension_numbers<[1], [0], [0], [1], [0, 0, 1, 1], [], []>} : vector<8x32xf32>, vector<32x64xf32>, vector<8x64xf32> -> vector<8x64xf32>
      %c0_118 = arith.constant 0 : index
      %c0_119 = arith.constant 0 : index
      %327 = vector.load %arg16[%c0_118, %c0_119] : memref<1x64xf32, #tpu.memory_space<vmem>>, vector<1x64xf32>
      %328 = vector.broadcast %327 : vector<1x64xf32> to vector<8x64xf32>
      %329 = arith.addf %326, %328 : vector<8x64xf32>
      %cst_120 = arith.constant 0.000000e+00 : f32
      %330 = vector.broadcast %cst_120 : f32 to vector<8x64xf32>
      %331 = arith.maximumf %329, %330 : vector<8x64xf32>
      %c0_121 = arith.constant 0 : index
      %c0_122 = arith.constant 0 : index
      %332 = vector.load %arg21[%c0_121, %c0_122] : memref<8x64xf32, #tpu.memory_space<vmem>>, vector<8x64xf32>
      tpu.vector_store %arg21[%c0_121, %c0_122], %331 {strides = array<i32>} : memref<8x64xf32, #tpu.memory_space<vmem>>, vector<8x64xf32>,
    } else {
    }
    %c0 = arith.constant 0 : index
    %c0_1 = arith.constant 0 : index
    %3 = vector.load %arg21[%c0, %c0_1] : memref<8x64xf32, #tpu.memory_space<vmem>>, vector<8x64xf32>
    %c0_2 = arith.constant 0 : index
    %c0_3 = arith.constant 0 : index
    %4 = vector.load %arg17[%c0_2, %c0_3] : memref<64x128xf32, #tpu.memory_space<vmem>>, vector<64x128xf32>
    %cst = arith.constant dense<0.000000e+00> : vector<8x128xf32>
    %5 = tpu.matmul %3, %4, %cst {dimension_numbers = #tpu.dot_dimension_numbers<[1], [0], [0], [1], [0, 0, 1, 1], [], []>} : vector<8x64xf32>, vector<64x128xf32>, vector<8x128xf32> -> vector<8x128xf32>
    %c0_4 = arith.constant 0 : index
    %c0_5 = arith.constant 0 : index
    %6 = vector.load %arg18[%c0_4, %c0_5] : memref<1x128xf32, #tpu.memory_space<vmem>>, vector<1x128xf32>
    %7 = vector.broadcast %6 : vector<1x128xf32> to vector<8x128xf32>
    %8 = arith.addf %5, %7 : vector<8x128xf32>
    %c0_6 = arith.constant 0 : index
    %c0_7 = arith.constant 0 : index
    %9 = vector.load %arg19[%c0_6, %c0_7] : memref<8x128xf32, #tpu.memory_space<vmem>>, vector<8x128xf32>
    tpu.vector_store %arg19[%c0_6, %c0_7], %8 {strides = array<i32>} : memref<8x128xf32, #tpu.memory_space<vmem>>, vector<8x128xf32>,
    return
  }
  func.func @transform_0(%arg0: i32) -> (i32, i32) {
    %c0_i32 = arith.constant 0 : i32
    %c0_i32_0 = arith.constant 0 : i32
    %c0_i32_1 = arith.constant 0 : i32
    return %c0_i32, %c0_i32_0 : i32, i32
  }
  func.func @transform_1(%arg0: i32) -> (i32, i32, i32) {
    %c0_i32 = arith.constant 0 : i32
    %c0_i32_0 = arith.constant 0 : i32
    %c0_i32_1 = arith.constant 0 : i32
    %c0_i32_2 = arith.constant 0 : i32
    return %c0_i32, %c0_i32_0, %c0_i32_1 : i32, i32, i32
  }
  func.func @transform_2(%arg0: i32) -> (i32, i32) {
    %c0_i32 = arith.constant 0 : i32
    %c0_i32_0 = arith.constant 0 : i32
    %c0_i32_1 = arith.constant 0 : i32
    return %c0_i32, %c0_i32_0 : i32, i32
  }
  func.func @transform_3(%arg0: i32) -> (i32, i32) {
    %c0_i32 = arith.constant 0 : i32
    %c0_i32_0 = arith.constant 0 : i32
    %c0_i32_1 = arith.constant 0 : i32
    return %c0_i32, %c0_i32_0 : i32, i32
  }
  func.func @transform_4(%arg0: i32) -> (i32, i32) {
    %c0_i32 = arith.constant 0 : i32
    %c0_i32_0 = arith.constant 0 : i32
    %c0_i32_1 = arith.constant 0 : i32
    return %c0_i32, %c0_i32_0 : i32, i32
  }
  func.func @transform_5(%arg0: i32) -> (i32, i32) {
    %c0_i32 = arith.constant 0 : i32
    %c0_i32_0 = arith.constant 0 : i32
    %c0_i32_1 = arith.constant 0 : i32
    return %c0_i32, %c0_i32_0 : i32, i32
  }
  func.func @transform_6(%arg0: i32) -> (i32, i32) {
    %c0_i32 = arith.constant 0 : i32
    %c0_i32_0 = arith.constant 0 : i32
    %c0_i32_1 = arith.constant 0 : i32
    return %c0_i32, %c0_i32_0 : i32, i32
  }
  func.func @transform_7(%arg0: i32) -> (i32, i32) {
    %c0_i32 = arith.constant 0 : i32
    %c0_i32_0 = arith.constant 0 : i32
    %c0_i32_1 = arith.constant 0 : i32
    return %c0_i32, %c0_i32_0 : i32, i32
  }
  func.func @transform_8(%arg0: i32) -> (i32, i32) {
    %c0_i32 = arith.constant 0 : i32
    %c0_i32_0 = arith.constant 0 : i32
    %c0_i32_1 = arith.constant 0 : i32
    return %c0_i32, %c0_i32_0 : i32, i32
  }
  func.func @transform_9(%arg0: i32) -> (i32, i32) {
    %c0_i32 = arith.constant 0 : i32
    %c0_i32_0 = arith.constant 0 : i32
    %c0_i32_1 = arith.constant 0 : i32
    return %c0_i32, %c0_i32_0 : i32, i32
  }
  func.func @transform_10(%arg0: i32) -> (i32, i32) {
    %c0_i32 = arith.constant 0 : i32
    %c0_i32_0 = arith.constant 0 : i32
    %c0_i32_1 = arith.constant 0 : i32
    return %c0_i32, %c0_i32_0 : i32, i32
  }
  func.func @transform_11(%arg0: i32) -> (i32, i32) {
    %c0_i32 = arith.constant 0 : i32
    %c0_i32_0 = arith.constant 0 : i32
    %c0_i32_1 = arith.constant 0 : i32
    return %c0_i32, %c0_i32_0 : i32, i32
  }
  func.func @transform_12(%arg0: i32) -> (i32, i32) {
    %c0_i32 = arith.constant 0 : i32
    %c0_i32_0 = arith.constant 0 : i32
    %c0_i32_1 = arith.constant 0 : i32
    return %c0_i32, %c0_i32_0 : i32, i32
  }
  func.func @transform_13(%arg0: i32) -> (i32, i32) {
    %c0_i32 = arith.constant 0 : i32
    %c0_i32_0 = arith.constant 0 : i32
    %c0_i32_1 = arith.constant 0 : i32
    return %c0_i32, %c0_i32_0 : i32, i32
  }
  func.func @transform_14(%arg0: i32) -> (i32, i32) {
    %c0_i32 = arith.constant 0 : i32
    %c0_i32_0 = arith.constant 0 : i32
    %c0_i32_1 = arith.constant 0 : i32
    return %c0_i32, %c0_i32_0 : i32, i32
  }
  func.func @transform_15(%arg0: i32) -> (i32, i32) {
    %c0_i32 = arith.constant 0 : i32
    %c0_i32_0 = arith.constant 0 : i32
    %c0_i32_1 = arith.constant 0 : i32
    return %c0_i32, %c0_i32_0 : i32, i32
  }
  func.func @transform_16(%arg0: i32) -> (i32, i32) {
    %c0_i32 = arith.constant 0 : i32
    %c0_i32_0 = arith.constant 0 : i32
    return %c0_i32, %arg0 : i32, i32
  }
  func.func @transform_17(%arg0: i32) -> (i32, i32) {
    %c0_i32 = arith.constant 0 : i32
    %c0_i32_0 = arith.constant 0 : i32
    return %c0_i32, %arg0 : i32, i32
  }
  func.func @transform_18(%arg0: i32) -> (i32, i32) {
    %c0_i32 = arith.constant 0 : i32
    %c0_i32_0 = arith.constant 0 : i32
    return %c0_i32, %arg0 : i32, i32
  }
}

</mosaic_0001>

<llo_original>
// kernel: tpu_custom_call.1
$region0: #{tpu_custom_call.1}
  #allocation0 [shape = 'u32[]', space=smem, size = 0x4, offset = 0x4, fixed_abs, tag = 'smem constant byte address 0x4 - core index']
  #allocation1 [shape = 'u32[72,128]{1,0:T(1,128)}', space=vmem, size = 0x9000, scoped, tag = 'internal scratch']
  #allocation2 [shape = 'f32[64,96]{1,0:T(8,128)}', space=vmem, size = 0x8000, scoped, tag = 'scratch operand']
  #allocation3 [shape = 'f32[8,64]{1,0:T(8,128)}', space=vmem, size = 0x1000, scoped, tag = 'scratch operand']
  %s0 = inlined_call_operand.vmem [shape: f32[64,16], index: 0, kind: input, shape index: {}]
  %s1 = inlined_call_operand.vmem [shape: f32[8,8,16], index: 1, kind: input, shape index: {}]
  %s2 = inlined_call_operand.vmem [shape: f32[16,96], index: 2, kind: input, shape index: {}]
  %s3 = inlined_call_operand.hbm [shape: f32[32,96], index: 3, kind: input, shape index: {}]
  %s4 = inlined_call_operand.vmem [shape: f32[1,96], index: 4, kind: input, shape index: {}]
  %s5 = inlined_call_operand.vmem [shape: f32[1,32], index: 5, kind: input, shape index: {}]
  %s6 = inlined_call_operand.hbm [shape: f32[16,32], index: 6, kind: input, shape index: {}]
  %s7 = inlined_call_operand.hbm [shape: f32[32,32], index: 7, kind: input, shape index: {}]
  %s8 = inlined_call_operand.vmem [shape: f32[1,32], index: 8, kind: input, shape index: {}]
  %s9 = inlined_call_operand.vmem [shape: f32[1,32], index: 9, kind: input, shape index: {}]
  %s10 = inlined_call_operand.hbm [shape: f32[32,32], index: 10, kind: input, shape index: {}]
  %s11 = inlined_call_operand.vmem [shape: f32[1,32], index: 11, kind: input, shape index: {}]
  %s12 = inlined_call_operand.hbm [shape: f32[16,32], index: 12, kind: input, shape index: {}]
  %s13 = inlined_call_operand.vmem [shape: f32[1,32], index: 13, kind: input, shape index: {}]
  %s14 = inlined_call_operand.hbm [shape: f32[32,64], index: 14, kind: input, shape index: {}]
  %s15 = inlined_call_operand.vmem [shape: f32[1,64], index: 15, kind: input, shape index: {}]
  %s16 = inlined_call_operand.hbm [shape: f32[64,256], index: 16, kind: input, shape index: {}]
  %s17 = inlined_call_operand.vmem [shape: f32[1,256], index: 17, kind: input, shape index: {}]
  %s18 = inlined_call_operand.hbm [shape: f32[8,256], index: 18, kind: output, shape index: {}]
  %s19 = sld [smem:[#allocation0]]
  $region137: #{tpu_custom_call.1} parent=0
    _
  %s21 = ssub.s32 1, %s19
  %s22 = scalar_select 0, %s21, %s19
  $region1: #{tpu_custom_call.1} parent=0
    #allocation4 [shape = 'u8[16384]{0}', space=vmem, size = 0x4000, scoped, tag = 'input window, operand 3, single buffered']
    #allocation5 [shape = 's32[2]{0}', space=sflag, size = 0x8, scoped, tag = 'scoped memory for tpu_custom_call.1']
    #allocation6 [shape = 's32[2]{0}', space=sflag, size = 0x8, scoped, tag = 'scoped memory for tpu_custom_call.1']
    #allocation7 [shape = 'u8[8192]{0}', space=vmem, size = 0x2000, scoped, tag = 'input window, operand 6, single buffered']
    #allocation8 [shape = 's32[1]{0}', space=sflag, size = 0x4, scoped, tag = 'scoped memory for tpu_custom_call.1']
    #allocation9 [shape = 'u8[16384]{0}', space=vmem, size = 0x4000, scoped, tag = 'input window, operand 7, single buffered']
    #allocation10 [shape = 'u8[16384]{0}', space=vmem, size = 0x4000, scoped, tag = 'input window, operand 10, single buffered']
    #allocation11 [shape = 's32[1]{0}', space=sflag, size = 0x4, scoped, tag = 'scoped memory for tpu_custom_call.1']
    #allocation12 [shape = 'u8[8192]{0}', space=vmem, size = 0x2000, scoped, tag = 'input window, operand 12, single buffered']
    #allocation13 [shape = 'u8[16384]{0}', space=vmem, size = 0x4000, scoped, tag = 'input window, operand 14, single buffered']
    #allocation14 [shape = 's32[1]{0}', space=sflag, size = 0x4, scoped, tag = 'scoped memory for tpu_custom_call.1']
    #allocation15 [shape = 'u8[65536]{0}', space=vmem, size = 0x10000, scoped, tag = 'input window, operand 16']
    #allocation16 [shape = 'u8[8192]{0}', space=vmem, size = 0x2000, scoped, tag = 'output window, operand 0']
    %23 = vsyncpa [#allocation5], 0
    %24 = vsyncpa [#allocation8], 0
    %25 = vsyncpa [#allocation11], 0
    %26 = vsyncpa [#allocation14], 0
    %27 = vsyncpa [#allocation6], 0
    %s28 = scalar_lea.sflag [#allocation6], 1
    %29 = vsyncpa %s28, 0
    loop: start=0, step=1, limit=4
    $region2: #{tpu_custom_call.1} parent=1 // loop_pre_header
      _
    $region3: #{tpu_custom_call.1} parent=1 // loop_header
      %s31 = sphi 0, %s35
      %p32 = scmp.ge.s32.totalorder %s31, 4
      %s39 = sphi 0, %s39
      %s41 = sphi 0, %s39
      %s42 = sphi 0, %s41
      %s56 = sphi 0, %s42
      %s60 = sphi 0, %s60
      %s62 = sphi 0, %s60
      %s63 = sphi 0, %s62
      %s77 = sphi 0, %s63
      %s81 = sphi 0, %s81
      %s83 = sphi 0, %s81
      %s84 = sphi 0, %s83
      %s98 = sphi 0, %s84
      %s102 = sphi 0, %s102
      %s104 = sphi 0, %s102
      %s105 = sphi 0, %s104
      %s119 = sphi 0, %s105
      %s123 = sphi 0, %s123
      %s125 = sphi 0, %s123
      %s126 = sphi 0, %s125
      %s140 = sphi 0, %s126
      %s144 = sphi 0, %s144
      %s146 = sphi 0, %s144
      %s147 = sphi 0, %s146
      %s161 = sphi 0, %s147
      %s165 = sphi 0, %s165
      %s167 = sphi 0, %s165
      %s168 = sphi 0, %s167
      %s182 = sphi 0, %s168
      %s186 = sphi 0, %s186
      %s188 = sphi 0, %s186
      %s189 = sphi 0, %s188
      %s203 = sphi 0, %s189
      %s207 = sphi 0, %s207
      %s209 = sphi 0, %s207
      %s210 = sphi 0, %s209
      %s224 = sphi 0, %s210
      %s228 = sphi 0, %s228
      %s230 = sphi 0, %s228
      %s231 = sphi 0, %s230
      %s245 = sphi 0, %s231
      %s249 = sphi 0, %s249
      %s251 = sphi 0, %s249
      %s252 = sphi 0, %s251
      %s266 = sphi 0, %s252
      %s270 = sphi 0, %s270
      %s272 = sphi 0, %s270
      %s273 = sphi 0, %s272
      %s287 = sphi 0, %s273
      %s291 = sphi 0, %s291
      %s293 = sphi 0, %s291
      %s294 = sphi 0, %s293
      %s308 = sphi 0, %s294
      %s312 = sphi 0, %s312
      %s314 = sphi 0, %s312
      %s315 = sphi 0, %s314
      %s329 = sphi 0, %s315
      %s333 = sphi 0, %s333
      %s335 = sphi 0, %s333
      %s336 = sphi 0, %s335
      %s350 = sphi 0, %s336
      %s354 = sphi 0, %s354
      %s356 = sphi 0, %s354
      %s357 = sphi 0, %s356
      %s371 = sphi 0, %s357
      %s377 = sphi 0, %s379
      %s380 = sphi 0, %s377
      %s381 = sphi 0, %s380
      %s397 = sphi 0, %s381
      %s403 = sphi 0, %s405
      %s406 = sphi 0, %s403
      %s407 = sphi 0, %s406
      %s423 = sphi 0, %s407
      %s429 = sphi 0, %s431
      %s432 = sphi 0, %s429
      %s433 = sphi 0, %s432
      %s449 = sphi 0, %s433
    $region4: #{tpu_custom_call.1} parent=1 // loop_header_branch
      %34 = sbr.rel (%p32) target = $region8
    $region5: #{tpu_custom_call.1} parent=1 // loop_body
      %s36 = ssub.s32 %s31, 1
      %s37 = ssub.s32 %s31, 2
      %s38 = sadd.s32 %s31, 1
      %s40 = sadd.s32 %s39, 1
      %p43 = scmp.eq.s32.totalorder %s31, 1
      %p44 = scmp.ne.s32.totalorder %s39, %s41
      %p45 = scmp.eq.s32.totalorder %s31, 0
      %p46 = por %p44, %p45
      %p47 = scmp.ne.s32.totalorder %s39, %s41
      %p48 = scmp.eq.s32.totalorder %s36, 1
      %p49 = por %p47, %p48
      %p50 = scmp.ne.s32.totalorder %s41, %s42
      %p51 = scmp.eq.s32.totalorder %s36, 0
      %p52 = por %p50, %p51
      %p53 = scmp.ne.s32.totalorder %s41, %s42
      %p54 = scmp.eq.s32.totalorder %s37, 1
      %p55 = por %p53, %p54
      %p57 = scmp.ne.s32.totalorder %s42, %s56
      %p58 = scmp.eq.s32.totalorder %s37, 0
      %p59 = por %p57, %p58
      %s61 = sadd.s32 %s60, 1
      %p64 = scmp.eq.s32.totalorder %s31, 1
      %p65 = scmp.ne.s32.totalorder %s60, %s62
      %p66 = scmp.eq.s32.totalorder %s31, 0
      %p67 = por %p65, %p66
      %p68 = scmp.ne.s32.totalorder %s60, %s62
      %p69 = scmp.eq.s32.totalorder %s36, 1
      %p70 = por %p68, %p69
      %p71 = scmp.ne.s32.totalorder %s62, %s63
      %p72 = scmp.eq.s32.totalorder %s36, 0
      %p73 = por %p71, %p72
      %p74 = scmp.ne.s32.totalorder %s62, %s63
      %p75 = scmp.eq.s32.totalorder %s37, 1
      %p76 = por %p74, %p75
      %p78 = scmp.ne.s32.totalorder %s63, %s77
      %p79 = scmp.eq.s32.totalorder %s37, 0
      %p80 = por %p78, %p79
      %s82 = sadd.s32 %s81, 1
      %p85 = scmp.eq.s32.totalorder %s31, 1
      %p86 = scmp.ne.s32.totalorder %s81, %s83
      %p87 = scmp.eq.s32.totalorder %s31, 0
      %p88 = por %p86, %p87
      %p89 = scmp.ne.s32.totalorder %s81, %s83
      %p90 = scmp.eq.s32.totalorder %s36, 1
      %p91 = por %p89, %p90
      %p92 = scmp.ne.s32.totalorder %s83, %s84
      %p93 = scmp.eq.s32.totalorder %s36, 0
      %p94 = por %p92, %p93
      %p95 = scmp.ne.s32.totalorder %s83, %s84
      %p96 = scmp.eq.s32.totalorder %s37, 1
      %p97 = por %p95, %p96
      %p99 = scmp.ne.s32.totalorder %s84, %s98
      %p100 = scmp.eq.s32.totalorder %s37, 0
      %p101 = por %p99, %p100
      %s103 = sadd.s32 %s102, 1
      %p106 = scmp.eq.s32.totalorder %s31, 1
      %p107 = scmp.ne.s32.totalorder %s102, %s104
      %p108 = scmp.eq.s32.totalorder %s31, 0
      %p109 = por %p107, %p108
      %p110 = scmp.ne.s32.totalorder %s102, %s104
      %p111 = scmp.eq.s32.totalorder %s36, 1
      %p112 = por %p110, %p111
      %p113 = scmp.ne.s32.totalorder %s104, %s105
      %p114 = scmp.eq.s32.totalorder %s36, 0
      %p115 = por %p113, %p114
      %p116 = scmp.ne.s32.totalorder %s104, %s105
      %p117 = scmp.eq.s32.totalorder %s37, 1
      %p118 = por %p116, %p117
      %p120 = scmp.ne.s32.totalorder %s105, %s119
      %p121 = scmp.eq.s32.totalorder %s37, 0
      %p122 = por %p120, %p121
      %s124 = sadd.s32 %s123, 1
      %p127 = scmp.eq.s32.totalorder %s31, 1
      %p128 = scmp.ne.s32.totalorder %s123, %s125
      %p129 = scmp.eq.s32.totalorder %s31, 0
      %p130 = por %p128, %p129
      %p131 = scmp.ne.s32.totalorder %s123, %s125
      %p132 = scmp.eq.s32.totalorder %s36, 1
      %p133 = por %p131, %p132
      %p134 = scmp.ne.s32.totalorder %s125, %s126
      %p135 = scmp.eq.s32.totalorder %s36, 0
      %p136 = por %p134, %p135
      %p137 = scmp.ne.s32.totalorder %s125, %s126
      %p138 = scmp.eq.s32.totalorder %s37, 1
      %p139 = por %p137, %p138
      %p141 = scmp.ne.s32.totalorder %s126, %s140
      %p142 = scmp.eq.s32.totalorder %s37, 0
      %p143 = por %p141, %p142
      %s145 = sadd.s32 %s144, 1
      %p148 = scmp.eq.s32.totalorder %s31, 1
      %p149 = scmp.ne.s32.totalorder %s144, %s146
      %p150 = scmp.eq.s32.totalorder %s31, 0
      %p151 = por %p149, %p150
      %p152 = scmp.ne.s32.totalorder %s144, %s146
      %p153 = scmp.eq.s32.totalorder %s36, 1
      %p154 = por %p152, %p153
      %p155 = scmp.ne.s32.totalorder %s146, %s147
      %p156 = scmp.eq.s32.totalorder %s36, 0
      %p157 = por %p155, %p156
      %p158 = scmp.ne.s32.totalorder %s146, %s147
      %p159 = scmp.eq.s32.totalorder %s37, 1
      %p160 = por %p158, %p159
      %p162 = scmp.ne.s32.totalorder %s147, %s161
      %p163 = scmp.eq.s32.totalorder %s37, 0
      %p164 = por %p162, %p163
      %s166 = sadd.s32 %s165, 1
      %p169 = scmp.eq.s32.totalorder %s31, 1
      %p170 = scmp.ne.s32.totalorder %s165, %s167
      %p171 = scmp.eq.s32.totalorder %s31, 0
      %p172 = por %p170, %p171
      %p173 = scmp.ne.s32.totalorder %s165, %s167
      %p174 = scmp.eq.s32.totalorder %s36, 1
      %p175 = por %p173, %p174
      %p176 = scmp.ne.s32.totalorder %s167, %s168
      %p177 = scmp.eq.s32.totalorder %s36, 0
      %p178 = por %p176, %p177
      %p179 = scmp.ne.s32.totalorder %s167, %s168
      %p180 = scmp.eq.s32.totalorder %s37, 1
      %p181 = por %p179, %p180
      %p183 = scmp.ne.s32.totalorder %s168, %s182
      %p184 = scmp.eq.s32.totalorder %s37, 0
      %p185 = por %p183, %p184
      %s187 = sadd.s32 %s186, 1
      %p190 = scmp.eq.s32.totalorder %s31, 1
      %p191 = scmp.ne.s32.totalorder %s186, %s188
      %p192 = scmp.eq.s32.totalorder %s31, 0
      %p193 = por %p191, %p192
      %p194 = scmp.ne.s32.totalorder %s186, %s188
      %p195 = scmp.eq.s32.totalorder %s36, 1
      %p196 = por %p194, %p195
      %p197 = scmp.ne.s32.totalorder %s188, %s189
      %p198 = scmp.eq.s32.totalorder %s36, 0
      %p199 = por %p197, %p198
      %p200 = scmp.ne.s32.totalorder %s188, %s189
      %p201 = scmp.eq.s32.totalorder %s37, 1
      %p202 = por %p200, %p201
      %p204 = scmp.ne.s32.totalorder %s189, %s203
      %p205 = scmp.eq.s32.totalorder %s37, 0
      %p206 = por %p204, %p205
      %s208 = sadd.s32 %s207, 1
      %p211 = scmp.eq.s32.totalorder %s31, 1
      %p212 = scmp.ne.s32.totalorder %s207, %s209
      %p213 = scmp.eq.s32.totalorder %s31, 0
      %p214 = por %p212, %p213
      %p215 = scmp.ne.s32.totalorder %s207, %s209
      %p216 = scmp.eq.s32.totalorder %s36, 1
      %p217 = por %p215, %p216
      %p218 = scmp.ne.s32.totalorder %s209, %s210
      %p219 = scmp.eq.s32.totalorder %s36, 0
      %p220 = por %p218, %p219
      %p221 = scmp.ne.s32.totalorder %s209, %s210
      %p222 = scmp.eq.s32.totalorder %s37, 1
      %p223 = por %p221, %p222
      %p225 = scmp.ne.s32.totalorder %s210, %s224
      %p226 = scmp.eq.s32.totalorder %s37, 0
      %p227 = por %p225, %p226
      %s229 = sadd.s32 %s228, 1
      %p232 = scmp.eq.s32.totalorder %s31, 1
      %p233 = scmp.ne.s32.totalorder %s228, %s230
      %p234 = scmp.eq.s32.totalorder %s31, 0
      %p235 = por %p233, %p234
      %p236 = scmp.ne.s32.totalorder %s228, %s230
      %p237 = scmp.eq.s32.totalorder %s36, 1
      %p238 = por %p236, %p237
      %p239 = scmp.ne.s32.totalorder %s230, %s231
      %p240 = scmp.eq.s32.totalorder %s36, 0
      %p241 = por %p239, %p240
      %p242 = scmp.ne.s32.totalorder %s230, %s231
      %p243 = scmp.eq.s32.totalorder %s37, 1
      %p244 = por %p242, %p243
      %p246 = scmp.ne.s32.totalorder %s231, %s245
      %p247 = scmp.eq.s32.totalorder %s37, 0
      %p248 = por %p246, %p247
      %s250 = sadd.s32 %s249, 1
      %p253 = scmp.eq.s32.totalorder %s31, 1
      %p254 = scmp.ne.s32.totalorder %s249, %s251
      %p255 = scmp.eq.s32.totalorder %s31, 0
      %p256 = por %p254, %p255
      %p257 = scmp.ne.s32.totalorder %s249, %s251
      %p258 = scmp.eq.s32.totalorder %s36, 1
      %p259 = por %p257, %p258
      %p260 = scmp.ne.s32.totalorder %s251, %s252
      %p261 = scmp.eq.s32.totalorder %s36, 0
      %p262 = por %p260, %p261
      %p263 = scmp.ne.s32.totalorder %s251, %s252
      %p264 = scmp.eq.s32.totalorder %s37, 1
      %p265 = por %p263, %p264
      %p267 = scmp.ne.s32.totalorder %s252, %s266
      %p268 = scmp.eq.s32.totalorder %s37, 0
      %p269 = por %p267, %p268
      %s271 = sadd.s32 %s270, 1
      %p274 = scmp.eq.s32.totalorder %s31, 1
      %p275 = scmp.ne.s32.totalorder %s270, %s272
      %p276 = scmp.eq.s32.totalorder %s31, 0
      %p277 = por %p275, %p276
      %p278 = scmp.ne.s32.totalorder %s270, %s272
      %p279 = scmp.eq.s32.totalorder %s36, 1
      %p280 = por %p278, %p279
      %p281 = scmp.ne.s32.totalorder %s272, %s273
      %p282 = scmp.eq.s32.totalorder %s36, 0
      %p283 = por %p281, %p282
      %p284 = scmp.ne.s32.totalorder %s272, %s273
      %p285 = scmp.eq.s32.totalorder %s37, 1
      %p286 = por %p284, %p285
      %p288 = scmp.ne.s32.totalorder %s273, %s287
      %p289 = scmp.eq.s32.totalorder %s37, 0
      %p290 = por %p288, %p289
      %s292 = sadd.s32 %s291, 1
      %p295 = scmp.eq.s32.totalorder %s31, 1
      %p296 = scmp.ne.s32.totalorder %s291, %s293
      %p297 = scmp.eq.s32.totalorder %s31, 0
      %p298 = por %p296, %p297
      %p299 = scmp.ne.s32.totalorder %s291, %s293
      %p300 = scmp.eq.s32.totalorder %s36, 1
      %p301 = por %p299, %p300
      %p302 = scmp.ne.s32.totalorder %s293, %s294
      %p303 = scmp.eq.s32.totalorder %s36, 0
      %p304 = por %p302, %p303
      %p305 = scmp.ne.s32.totalorder %s293, %s294
      %p306 = scmp.eq.s32.totalorder %s37, 1
      %p307 = por %p305, %p306
      %p309 = scmp.ne.s32.totalorder %s294, %s308
      %p310 = scmp.eq.s32.totalorder %s37, 0
      %p311 = por %p309, %p310
      %s313 = sadd.s32 %s312, 1
      %p316 = scmp.eq.s32.totalorder %s31, 1
      %p317 = scmp.ne.s32.totalorder %s312, %s314
      %p318 = scmp.eq.s32.totalorder %s31, 0
      %p319 = por %p317, %p318
      %p320 = scmp.ne.s32.totalorder %s312, %s314
      %p321 = scmp.eq.s32.totalorder %s36, 1
      %p322 = por %p320, %p321
      %p323 = scmp.ne.s32.totalorder %s314, %s315
      %p324 = scmp.eq.s32.totalorder %s36, 0
      %p325 = por %p323, %p324
      %p326 = scmp.ne.s32.totalorder %s314, %s315
      %p327 = scmp.eq.s32.totalorder %s37, 1
      %p328 = por %p326, %p327
      %p330 = scmp.ne.s32.totalorder %s315, %s329
      %p331 = scmp.eq.s32.totalorder %s37, 0
      %p332 = por %p330, %p331
      %s334 = sadd.s32 %s333, 1
      %p337 = scmp.eq.s32.totalorder %s31, 1
      %p338 = scmp.ne.s32.totalorder %s333, %s335
      %p339 = scmp.eq.s32.totalorder %s31, 0
      %p340 = por %p338, %p339
      %p341 = scmp.ne.s32.totalorder %s333, %s335
      %p342 = scmp.eq.s32.totalorder %s36, 1
      %p343 = por %p341, %p342
      %p344 = scmp.ne.s32.totalorder %s335, %s336
      %p345 = scmp.eq.s32.totalorder %s36, 0
      %p346 = por %p344, %p345
      %p347 = scmp.ne.s32.totalorder %s335, %s336
      %p348 = scmp.eq.s32.totalorder %s37, 1
      %p349 = por %p347, %p348
      %p351 = scmp.ne.s32.totalorder %s336, %s350
      %p352 = scmp.eq.s32.totalorder %s37, 0
      %p353 = por %p351, %p352
      %s355 = sadd.s32 %s354, 1
      %p358 = scmp.eq.s32.totalorder %s31, 1
      %p359 = scmp.ne.s32.totalorder %s354, %s356
      %p360 = scmp.eq.s32.totalorder %s31, 0
      %p361 = por %p359, %p360
      %p362 = scmp.ne.s32.totalorder %s354, %s356
      %p363 = scmp.eq.s32.totalorder %s36, 1
      %p364 = por %p362, %p363
      %p365 = scmp.ne.s32.totalorder %s356, %s357
      %p366 = scmp.eq.s32.totalorder %s36, 0
      %p367 = por %p365, %p366
      %p368 = scmp.ne.s32.totalorder %s356, %s357
      %p369 = scmp.eq.s32.totalorder %s37, 1
      %p370 = por %p368, %p369
      %p372 = scmp.ne.s32.totalorder %s357, %s371
      %p373 = scmp.eq.s32.totalorder %s37, 0
      %p374 = por %p372, %p373
      %s375 = ssub.s32 %s31, %s38
      %p376 = scmp.eq.s32.totalorder %s375, 0
      %s378 = sadd.s32 %s377, 1
      %s379 = scalar_select %p376, %s377, %s378
      %p382 = pneg %p376
      %p383 = scmp.eq.s32.totalorder %s31, 1
      %p384 = por %p382, %p383
      %p385 = scmp.ne.s32.totalorder %s377, %s380
      %p386 = scmp.eq.s32.totalorder %s31, 0
      %p387 = por %p385, %p386
      %p388 = scmp.ne.s32.totalorder %s377, %s380
      %p389 = scmp.eq.s32.totalorder %s36, 1
      %p390 = por %p388, %p389
      %p391 = scmp.ne.s32.totalorder %s380, %s381
      %p392 = scmp.eq.s32.totalorder %s36, 0
      %p393 = por %p391, %p392
      %p394 = scmp.ne.s32.totalorder %s380, %s381
      %p395 = scmp.eq.s32.totalorder %s37, 1
      %p396 = por %p394, %p395
      %p398 = scmp.ne.s32.totalorder %s381, %s397
      %p399 = scmp.eq.s32.totalorder %s37, 0
      %p400 = por %p398, %p399
      %s401 = ssub.s32 %s31, %s38
      %p402 = scmp.eq.s32.totalorder %s401, 0
      %s404 = sadd.s32 %s403, 1
      %s405 = scalar_select %p402, %s403, %s404
      %p408 = pneg %p402
      %p409 = scmp.eq.s32.totalorder %s31, 1
      %p410 = por %p408, %p409
      %p411 = scmp.ne.s32.totalorder %s403, %s406
      %p412 = scmp.eq.s32.totalorder %s31, 0
      %p413 = por %p411, %p412
      %p414 = scmp.ne.s32.totalorder %s403, %s406
      %p415 = scmp.eq.s32.totalorder %s36, 1
      %p416 = por %p414, %p415
      %p417 = scmp.ne.s32.totalorder %s406, %s407
      %p418 = scmp.eq.s32.totalorder %s36, 0
      %p419 = por %p417, %p418
      %p420 = scmp.ne.s32.totalorder %s406, %s407
      %p421 = scmp.eq.s32.totalorder %s37, 1
      %p422 = por %p420, %p421
      %p424 = scmp.ne.s32.totalorder %s407, %s423
      %p425 = scmp.eq.s32.totalorder %s37, 0
      %p426 = por %p424, %p425
      %s427 = ssub.s32 %s31, %s38
      %p428 = scmp.eq.s32.totalorder %s427, 0
      %s430 = sadd.s32 %s429, 1
      %s431 = scalar_select %p428, %s429, %s430
      %p434 = pneg %p428
      %p435 = scmp.eq.s32.totalorder %s31, 1
      %p436 = por %p434, %p435
      %p437 = scmp.ne.s32.totalorder %s429, %s432
      %p438 = scmp.eq.s32.totalorder %s31, 0
      %p439 = por %p437, %p438
      %p440 = scmp.ne.s32.totalorder %s429, %s432
      %p441 = scmp.eq.s32.totalorder %s36, 1
      %p442 = por %p440, %p441
      %p443 = scmp.ne.s32.totalorder %s432, %s433
      %p444 = scmp.eq.s32.totalorder %s36, 0
      %p445 = por %p443, %p444
      %p446 = scmp.ne.s32.totalorder %s432, %s433
      %p447 = scmp.eq.s32.totalorder %s37, 1
      %p448 = por %p446, %p447
      %p450 = scmp.ne.s32.totalorder %s433, %s449
      %p451 = scmp.eq.s32.totalorder %s37, 0
      %p452 = por %p450, %p451
      %p453 = scmp.le.s32.totalorder 1, %s31
      %p454 = scmp.lt.s32.totalorder %s31, 3
      %p455 = pnand %p453, %p454
      %p456 = pneg %p455
      // Predicated region
      $region9: #{tpu_custom_call.1} parent=5 // pred_check
        _
      $region10: #{tpu_custom_call.1} parent=5 // pred_check_branch
        %458 = sbr.rel (%p455) target = $region12
      $region11: #{tpu_custom_call.1} parent=5 // pred_region
        %s459 = ssub.s32 %s31, 1
        // Predicated region
        $region13: #{tpu_custom_call.1} parent=11 // pred_check
          %p460 = pneg %p52
        $region14: #{tpu_custom_call.1} parent=11 // pred_check_branch
          %462 = sbr.rel (%p460) target = $region16
        $region15: #{tpu_custom_call.1} parent=11 // pred_region
          _
        $region16: #{tpu_custom_call.1} parent=11 // pred_fallthru
          _
        // Predicated region
        $region17: #{tpu_custom_call.1} parent=11 // pred_check
          %p463 = pneg %p73
        $region18: #{tpu_custom_call.1} parent=11 // pred_check_branch
          %465 = sbr.rel (%p463) target = $region20
        $region19: #{tpu_custom_call.1} parent=11 // pred_region
          _
        $region20: #{tpu_custom_call.1} parent=11 // pred_fallthru
          _
        // Predicated region
        $region21: #{tpu_custom_call.1} parent=11 // pred_check
          %p466 = pneg %p94
        $region22: #{tpu_custom_call.1} parent=11 // pred_check_branch
          %468 = sbr.rel (%p466) target = $region24
        $region23: #{tpu_custom_call.1} parent=11 // pred_region
          _
        $region24: #{tpu_custom_call.1} parent=11 // pred_fallthru
          _
        // Predicated region
        $region25: #{tpu_custom_call.1} parent=11 // pred_check
          %p469 = pneg %p115
        $region26: #{tpu_custom_call.1} parent=11 // pred_check_branch
          %471 = sbr.rel (%p469) target = $region28
        $region27: #{tpu_custom_call.1} parent=11 // pred_region
          %473 = vsyncadd [#allocation5], 0
          %s474 = sshll.u32 %s3, 4
          %s475 = int_to_ptr.hbm [resolvable:$true] %s474
          %s476 = sshll.u32 [#allocation4], 4
          %s477 = int_to_ptr.vmem [resolvable:$true] %s476
          %482 = dma.hbm_to_vmem [thread:$0]  %s475, 512, %s477, [#allocation5], 128, 128, 8
        $region28: #{tpu_custom_call.1} parent=11 // pred_fallthru
          _
        // Predicated region
        $region29: #{tpu_custom_call.1} parent=11 // pred_check
          %p483 = pneg %p136
        $region30: #{tpu_custom_call.1} parent=11 // pred_check_branch
          %485 = sbr.rel (%p483) target = $region32
        $region31: #{tpu_custom_call.1} parent=11 // pred_region
          _
        $region32: #{tpu_custom_call.1} parent=11 // pred_fallthru
          _
        // Predicated region
        $region33: #{tpu_custom_call.1} parent=11 // pred_check
          %p486 = pneg %p157
        $region34: #{tpu_custom_call.1} parent=11 // pred_check_branch
          %488 = sbr.rel (%p486) target = $region36
        $region35: #{tpu_custom_call.1} parent=11 // pred_region
          _
        $region36: #{tpu_custom_call.1} parent=11 // pred_fallthru
          _
        // Predicated region
        $region37: #{tpu_custom_call.1} parent=11 // pred_check
          %p489 = pneg %p178
        $region38: #{tpu_custom_call.1} parent=11 // pred_check_branch
          %491 = sbr.rel (%p489) target = $region40
        $region39: #{tpu_custom_call.1} parent=11 // pred_region
          %493 = vsyncadd [#allocation8], 0
          %s494 = sshll.u32 %s6, 4
          %s495 = int_to_ptr.hbm [resolvable:$true] %s494
          %s496 = sshll.u32 [#allocation7], 4
          %s497 = int_to_ptr.vmem [resolvable:$true] %s496
          %502 = dma.hbm_to_vmem [thread:$0]  %s495, 256, %s497, [#allocation8], 128, 128, 8
        $region40: #{tpu_custom_call.1} parent=11 // pred_fallthru
          _
        // Predicated region
        $region41: #{tpu_custom_call.1} parent=11 // pred_check
          %p503 = pneg %p199
        $region42: #{tpu_custom_call.1} parent=11 // pred_check_branch
          %505 = sbr.rel (%p503) target = $region44
        $region43: #{tpu_custom_call.1} parent=11 // pred_region
          %507 = vsyncadd [#allocation8], 0
          %s508 = sshll.u32 %s7, 4
          %s509 = int_to_ptr.hbm [resolvable:$true] %s508
          %s510 = sshll.u32 [#allocation9], 4
          %s511 = int_to_ptr.vmem [resolvable:$true] %s510
          %516 = dma.hbm_to_vmem [thread:$0]  %s509, 512, %s511, [#allocation8], 128, 128, 8
        $region44: #{tpu_custom_call.1} parent=11 // pred_fallthru
          _
        // Predicated region
        $region45: #{tpu_custom_call.1} parent=11 // pred_check
          %p517 = pneg %p220
        $region46: #{tpu_custom_call.1} parent=11 // pred_check_branch
          %519 = sbr.rel (%p517) target = $region48
        $region47: #{tpu_custom_call.1} parent=11 // pred_region
          _
        $region48: #{tpu_custom_call.1} parent=11 // pred_fallthru
          _
        // Predicated region
        $region49: #{tpu_custom_call.1} parent=11 // pred_check
          %p520 = pneg %p241
        $region50: #{tpu_custom_call.1} parent=11 // pred_check_branch
          %522 = sbr.rel (%p520) target = $region52
        $region51: #{tpu_custom_call.1} parent=11 // pred_region
          _
        $region52: #{tpu_custom_call.1} parent=11 // pred_fallthru
          _
        // Predicated region
        $region53: #{tpu_custom_call.1} parent=11 // pred_check
          %p523 = pneg %p262
        $region54: #{tpu_custom_call.1} parent=11 // pred_check_branch
          %525 = sbr.rel (%p523) target = $region56
        $region55: #{tpu_custom_call.1} parent=11 // pred_region
          %527 = vsyncadd [#allocation11], 0
          %s528 = sshll.u32 %s10, 4
          %s529 = int_to_ptr.hbm [resolvable:$true] %s528
          %s530 = sshll.u32 [#allocation10], 4
          %s531 = int_to_ptr.vmem [resolvable:$true] %s530
          %536 = dma.hbm_to_vmem [thread:$0]  %s529, 512, %s531, [#allocation11], 128, 128, 8
        $region56: #{tpu_custom_call.1} parent=11 // pred_fallthru
          _
        // Predicated region
        $region57: #{tpu_custom_call.1} parent=11 // pred_check
          %p537 = pneg %p283
        $region58: #{tpu_custom_call.1} parent=11 // pred_check_branch
          %539 = sbr.rel (%p537) target = $region60
        $region59: #{tpu_custom_call.1} parent=11 // pred_region
          _
        $region60: #{tpu_custom_call.1} parent=11 // pred_fallthru
          _
        // Predicated region
        $region61: #{tpu_custom_call.1} parent=11 // pred_check
          %p540 = pneg %p304
        $region62: #{tpu_custom_call.1} parent=11 // pred_check_branch
          %542 = sbr.rel (%p540) target = $region64
        $region63: #{tpu_custom_call.1} parent=11 // pred_region
          %544 = vsyncadd [#allocation11], 0
          %s545 = sshll.u32 %s12, 4
          %s546 = int_to_ptr.hbm [resolvable:$true] %s545
          %s547 = sshll.u32 [#allocation12], 4
          %s548 = int_to_ptr.vmem [resolvable:$true] %s547
          %553 = dma.hbm_to_vmem [thread:$0]  %s546, 256, %s548, [#allocation11], 128, 128, 8
        $region64: #{tpu_custom_call.1} parent=11 // pred_fallthru
          _
        // Predicated region
        $region65: #{tpu_custom_call.1} parent=11 // pred_check
          %p554 = pneg %p325
        $region66: #{tpu_custom_call.1} parent=11 // pred_check_branch
          %556 = sbr.rel (%p554) target = $region68
        $region67: #{tpu_custom_call.1} parent=11 // pred_region
          _
        $region68: #{tpu_custom_call.1} parent=11 // pred_fallthru
          _
        // Predicated region
        $region69: #{tpu_custom_call.1} parent=11 // pred_check
          %p557 = pneg %p346
        $region70: #{tpu_custom_call.1} parent=11 // pred_check_branch
          %559 = sbr.rel (%p557) target = $region72
        $region71: #{tpu_custom_call.1} parent=11 // pred_region
          %561 = vsyncadd [#allocation14], 0
          %s562 = sshll.u32 %s14, 4
          %s563 = int_to_ptr.hbm [resolvable:$true] %s562
          %s564 = sshll.u32 [#allocation13], 4
          %s565 = int_to_ptr.vmem [resolvable:$true] %s564
          %570 = dma.hbm_to_vmem [thread:$0]  %s563, 512, %s565, [#allocation14], 128, 128, 8
        $region72: #{tpu_custom_call.1} parent=11 // pred_fallthru
          _
        // Predicated region
        $region73: #{tpu_custom_call.1} parent=11 // pred_check
          %p571 = pneg %p367
        $region74: #{tpu_custom_call.1} parent=11 // pred_check_branch
          %573 = sbr.rel (%p571) target = $region76
        $region75: #{tpu_custom_call.1} parent=11 // pred_region
          _
        $region76: #{tpu_custom_call.1} parent=11 // pred_fallthru
          _
      $region12: #{tpu_custom_call.1} parent=5 // pred_fallthru
        _
      %p574 = scmp.lt.s32.totalorder %s31, 2
      // Predicated region
      $region77: #{tpu_custom_call.1} parent=5 // pred_check
        %p575 = pneg %p574
      $region78: #{tpu_custom_call.1} parent=5 // pred_check_branch
        %577 = sbr.rel (%p575) target = $region80
      $region79: #{tpu_custom_call.1} parent=5 // pred_region
        // Predicated region
        $region81: #{tpu_custom_call.1} parent=79 // pred_check
          %p578 = pneg %p387
        $region82: #{tpu_custom_call.1} parent=79 // pred_check_branch
          %580 = sbr.rel (%p578) target = $region84
        $region83: #{tpu_custom_call.1} parent=79 // pred_region
          %s581 = sand.u32 %s31, 1
          %s582 = scalar_lea.sflag [#allocation5], %s581
          %s583 = sand.u32 %s377, 1
          %s584 = smul.addr %s583, 64
          %s585 = scalar_lea.vmem [#allocation15], %s584
          %587 = vsyncadd %s582, 0
          %s588 = smul.addr %s31, 8
          %s589 = scalar_lea.hbm %s16, %s588
          %s590 = sshll.u32 %s589, 4
          %s591 = int_to_ptr.hbm [resolvable:$true] %s590
          %s592 = sshll.u32 %s585, 4
          %s593 = int_to_ptr.vmem [resolvable:$true] %s592
          %598 = dma.hbm_to_vmem [thread:$0]  %s591, 1024, %s593, %s582, 256, 128, 8
        $region84: #{tpu_custom_call.1} parent=79 // pred_fallthru
          _
        // Predicated region
        $region85: #{tpu_custom_call.1} parent=79 // pred_check
          %p599 = pneg %p413
        $region86: #{tpu_custom_call.1} parent=79 // pred_check_branch
          %601 = sbr.rel (%p599) target = $region88
        $region87: #{tpu_custom_call.1} parent=79 // pred_region
          %p602 = scmp.lt.s32.totalorder %s31, 1
          %s603 = scalar_select %p602, %s31, 1
          %s604 = scalar_lea.vmem %s17, %s603
        $region88: #{tpu_custom_call.1} parent=79 // pred_fallthru
          _
      $region80: #{tpu_custom_call.1} parent=5 // pred_fallthru
        _
      %p605 = scmp.le.s32.totalorder 1, %s31
      %p606 = scmp.lt.s32.totalorder %s31, 3
      %p607 = pnand %p605, %p606
      %p608 = pneg %p607
      // Predicated region
      $region89: #{tpu_custom_call.1} parent=5 // pred_check
        _
      $region90: #{tpu_custom_call.1} parent=5 // pred_check_branch
        %610 = sbr.rel (%p607) target = $region92
      $region91: #{tpu_custom_call.1} parent=5 // pred_region
        %s611 = ssub.s32 %s31, 1
        // Predicated region
        $region93: #{tpu_custom_call.1} parent=91 // pred_check
          %p612 = pneg %p115
        $region94: #{tpu_custom_call.1} parent=91 // pred_check_branch
          %614 = sbr.rel (%p612) target = $region96
        $region95: #{tpu_custom_call.1} parent=91 // pred_region
          %616 = dma.done [#allocation5], 512
        $region96: #{tpu_custom_call.1} parent=91 // pred_fallthru
          _
        // Predicated region
        $region97: #{tpu_custom_call.1} parent=91 // pred_check
          %p617 = pneg %p178
        $region98: #{tpu_custom_call.1} parent=91 // pred_check_branch
          %619 = sbr.rel (%p617) target = $region100
        $region99: #{tpu_custom_call.1} parent=91 // pred_region
          %621 = dma.done [#allocation8], 256
        $region100: #{tpu_custom_call.1} parent=91 // pred_fallthru
          _
        // Predicated region
        $region101: #{tpu_custom_call.1} parent=91 // pred_check
          %p622 = pneg %p199
        $region102: #{tpu_custom_call.1} parent=91 // pred_check_branch
          %624 = sbr.rel (%p622) target = $region104
        $region103: #{tpu_custom_call.1} parent=91 // pred_region
          %626 = dma.done [#allocation8], 512
        $region104: #{tpu_custom_call.1} parent=91 // pred_fallthru
          _
        // Predicated region
        $region105: #{tpu_custom_call.1} parent=91 // pred_check
          %p627 = pneg %p262
        $region106: #{tpu_custom_call.1} parent=91 // pred_check_branch
          %629 = sbr.rel (%p627) target = $region108
        $region107: #{tpu_custom_call.1} parent=91 // pred_region
          %631 = dma.done [#allocation11], 512
        $region108: #{tpu_custom_call.1} parent=91 // pred_fallthru
          _
        // Predicated region
        $region109: #{tpu_custom_call.1} parent=91 // pred_check
          %p632 = pneg %p304
        $region110: #{tpu_custom_call.1} parent=91 // pred_check_branch
          %634 = sbr.rel (%p632) target = $region112
        $region111: #{tpu_custom_call.1} parent=91 // pred_region
          %636 = dma.done [#allocation11], 256
        $region112: #{tpu_custom_call.1} parent=91 // pred_fallthru
          _
        // Predicated region
        $region113: #{tpu_custom_call.1} parent=91 // pred_check
          %p637 = pneg %p346
        $region114: #{tpu_custom_call.1} parent=91 // pred_check_branch
          %639 = sbr.rel (%p637) target = $region116
        $region115: #{tpu_custom_call.1} parent=91 // pred_region
          %641 = dma.done [#allocation14], 512
        $region116: #{tpu_custom_call.1} parent=91 // pred_fallthru
          _
        %s642 = sand.u32 %s36, 1
        %s643 = scalar_lea.sflag [#allocation5], %s642
        %s644 = sand.u32 %s380, 1
        %s645 = smul.addr %s644, 64
        %s646 = scalar_lea.vmem [#allocation15], %s645
        // Predicated region
        $region117: #{tpu_custom_call.1} parent=91 // pred_check
          %p647 = pneg %p393
        $region118: #{tpu_custom_call.1} parent=91 // pred_check_branch
          %649 = sbr.rel (%p647) target = $region120
        $region119: #{tpu_custom_call.1} parent=91 // pred_region
          %651 = dma.done %s643, 1024
        $region120: #{tpu_custom_call.1} parent=91 // pred_fallthru
          _
        %p652 = pneg %p52
        %p653 = pneg %p49
        %p654 = pneg %p73
        %p655 = pneg %p70
        %p656 = pneg %p94
        %p657 = pneg %p91
        %p658 = pneg %p115
        %p659 = pneg %p112
        %p660 = pneg %p136
        %p661 = pneg %p133
        %p662 = pneg %p157
        %p663 = pneg %p154
        %p664 = pneg %p178
        %p665 = pneg %p175
        %p666 = pneg %p199
        %p667 = pneg %p196
        %p668 = pneg %p220
        %p669 = pneg %p217
        %p670 = pneg %p241
        %p671 = pneg %p238
        %p672 = pneg %p262
        %p673 = pneg %p259
        %p674 = pneg %p283
        %p675 = pneg %p280
        %p676 = pneg %p304
        %p677 = pneg %p301
        %p678 = pneg %p325
        %p679 = pneg %p322
        %p680 = pneg %p346
        %p681 = pneg %p343
        %p682 = pneg %p367
        %p683 = pneg %p364
        %s684 = sand.u32 %s36, 1
        %s685 = scalar_lea.sflag [#allocation5], %s684
        %s686 = sand.u32 %s380, 1
        %s687 = smul.addr %s686, 64
        %s688 = scalar_lea.vmem [#allocation15], %s687
        %p689 = pneg %p393
        %p690 = pneg %p390
        %p691 = scmp.lt.s32.totalorder %s36, 1
        %s692 = scalar_select %p691, %s36, 1
        %s693 = scalar_lea.vmem %s17, %s692
        %p694 = pneg %p419
        %p695 = pneg %p416
        %p696 = pneg %p445
        %p697 = pneg %p442
        %s698 = sand.u32 %s432, 1
        %s699 = scalar_lea.sflag [#allocation6], %s698
        %s700 = sand.u32 %s432, 1
        %s701 = smul.addr %s700, 8
        %s702 = scalar_lea.vmem [#allocation16], %s701
        %p703 = scmp.lt.s32.totalorder %s36, 1
        %s704 = scalar_select %p703, %s36, 1
        %s705 = scalar_lea.vmem %s17, %s704
        %p706 = scmp.eq.s32.totalorder %s36, 0
        // Predicated region
        $region121: #{tpu_custom_call.1} parent=91 // pred_check
          %p707 = pneg %p706
        $region122: #{tpu_custom_call.1} parent=91 // pred_check_branch
          %709 = sbr.rel (%p707) target = $region124
        $region123: #{tpu_custom_call.1} parent=91 // pred_region
          %v710 = vld [vmem:[%s0] sm:$0xff]
          %v711 = vld [vmem:[%s0 + $0x8] sm:$0xff]
          %v712 = vld [vmem:[%s0 + $0x10] sm:$0xff]
          %v713 = vld [vmem:[%s0 + $0x18] sm:$0xff]
          %v714 = vld [vmem:[%s0 + $0x20] sm:$0xff]
          %v715 = vld [vmem:[%s0 + $0x28] sm:$0xff]
          %v716 = vld [vmem:[%s0 + $0x30] sm:$0xff]
          %v717 = vld [vmem:[%s0 + $0x38] sm:$0xff]
          %v718 = vld [vmem:[%s2] sm:$0xff]
          %v719 = vld [vmem:[%s2 + $0x8] sm:$0xff]
          %v720 = vld [vmem:[%s4] sm:$0x1]
          %v722 = vperm.slane %v720, 0
          %vm724 = vcmask 130048
          %v726 = vsel %vm724, %v710, 0
          %v729 = vsel %vm724, %v711, 0
          %v732 = vsel %vm724, %v712, 0
          %v735 = vsel %vm724, %v713, 0
          %v738 = vsel %vm724, %v714, 0
          %v741 = vsel %vm724, %v715, 0
          %v744 = vsel %vm724, %v716, 0
          %v747 = vsel %vm724, %v717, 0
          %749 = vmatpush.msra.mxu0 0.0
          %750 = vmatpush.msra.mxu0 0.0
          %751 = vmatpush.msra.mxu0 0.0
          %752 = vmatpush.msra.mxu0 0.0
          %753 = vmatpush.msra.mxu0 0.0
          %754 = vmatpush.msra.mxu0 0.0
          %755 = vmatpush.msra.mxu0 0.0
          %756 = vmatpush.msra.mxu0 0.0
          %757 = vmatpush.msra.mxu0 0.0
          %758 = vmatpush.msra.mxu0 0.0
          %759 = vmatpush.msra.mxu0 0.0
          %760 = vmatpush.msra.mxu0 0.0
          %761 = vmatpush.msra.mxu0 0.0
          %762 = vmatpush.msra.mxu0 0.0
          %763 = vmatpush.msra.mxu0 %v719
          %764 = vmatpush.msra.mxu0 %v718
          %765 = vmatmul.f32.gmra.mxu0 %v726
          %v766 = vpop.f32.mrf.mxu0
          %v767 = vadd.f32 %v722, %v766
          %768 = vmatmul.f32.gmra.mxu0 %v729
          %v769 = vpop.f32.mrf.mxu0
          %v770 = vadd.f32 %v722, %v769
          %771 = vmatmul.f32.gmra.mxu0 %v732
          %v772 = vpop.f32.mrf.mxu0
          %v773 = vadd.f32 %v722, %v772
          %774 = vmatmul.f32.gmra.mxu0 %v735
          %v775 = vpop.f32.mrf.mxu0
          %v776 = vadd.f32 %v722, %v775
          %777 = vmatmul.f32.gmra.mxu0 %v738
          %v778 = vpop.f32.mrf.mxu0
          %v779 = vadd.f32 %v722, %v778
          %780 = vmatmul.f32.gmra.mxu0 %v741
          %v781 = vpop.f32.mrf.mxu0
          %v782 = vadd.f32 %v722, %v781
          %783 = vmatmul.f32.gmra.mxu0 %v744
          %v784 = vpop.f32.mrf.mxu0
          %v785 = vadd.f32 %v722, %v784
          %786 = vmatmul.f32.gmra.mxu0 %v747
          %v787 = vpop.f32.mrf.mxu0
          %v788 = vadd.f32 %v722, %v787
          %789 = vdwg.mxu0
          %vm790 = vcmask 785408
          %791 = vst.msk [vmem:[#allocation2] sm:$0xff] %vm790, %v767
          %792 = vst.msk [vmem:[#allocation2 + $0x8] sm:$0xff] %vm790, %v770
          %793 = vst.msk [vmem:[#allocation2 + $0x10] sm:$0xff] %vm790, %v773
          %794 = vst.msk [vmem:[#allocation2 + $0x18] sm:$0xff] %vm790, %v776
          %795 = vst.msk [vmem:[#allocation2 + $0x20] sm:$0xff] %vm790, %v779
          %796 = vst.msk [vmem:[#allocation2 + $0x28] sm:$0xff] %vm790, %v782
          %797 = vst.msk [vmem:[#allocation2 + $0x30] sm:$0xff] %vm790, %v785
          %798 = vst.msk [vmem:[#allocation2 + $0x38] sm:$0xff] %vm790, %v788
          %v799 = vld [vmem:[%s5] sm:$0x1]
          %v801 = vperm.slane %v799, 0
          %v802 = vld [vmem:[#allocation4] sm:$0xff]
          %v803 = vld [vmem:[#allocation4 + $0x8] sm:$0xff]
          %v804 = vld [vmem:[#allocation4 + $0x10] sm:$0xff]
          %v805 = vld [vmem:[#allocation4 + $0x18] sm:$0xff]
          %vm806 = vcmask 261120
          %v808 = vsel %vm806, 0.0, 0
          %810 = vmatpush.msra.mxu0 0.0
          %811 = vmatpush.msra.mxu0 0.0
          %812 = vmatpush.msra.mxu0 0.0
          %813 = vmatpush.msra.mxu0 0.0
          %814 = vmatpush.msra.mxu0 0.0
          %815 = vmatpush.msra.mxu0 0.0
          %816 = vmatpush.msra.mxu0 0.0
          %817 = vmatpush.msra.mxu0 0.0
          %818 = vmatpush.msra.mxu0 0.0
          %819 = vmatpush.msra.mxu0 0.0
          %820 = vmatpush.msra.mxu0 0.0
          %821 = vmatpush.msra.mxu0 0.0
          %822 = vmatpush.msra.mxu0 %v805
          %823 = vmatpush.msra.mxu0 %v804
          %824 = vmatpush.msra.mxu0 %v803
          %825 = vmatpush.msra.mxu0 %v802
          %826 = vmatmul.f32.gmra.mxu0 %v808
          %v827 = vpop.f32.mrf.mxu0
          %v828 = vadd.f32 0.0, %v827
          %829 = vdwg.mxu0
          %v830 = vld [vmem:[#allocation2] sm:$0xff]
          %v831 = vadd.f32 %v830, %v828
          %v832 = vxor.u32 %v831, 2147483648
          %v833 = vmul.f32 %v832, 1.442695
          %v834 = vpow.pop %v833
          %v835 = vadd.f32 %v834, 1.0
          %v836 = vrcp.pop %v835
          %v837 = vmul.f32 %v835, %v836
          %v838 = vsub.f32 1.0, %v837
          %v839 = vmul.f32 %v836, %v838
          %v840 = vadd.f32 %v836, %v839
          %vm841 = vweird.f32 %v835
          %vm842 = vweird.f32 %v836
          %vm843 = vmor %vm841, %vm842
          %v844 = vsel %vm843, %v836, %v840
          %v845 = vand.u32 2147483647, %v835
          %vm846 = vcmp.eq.f32.partialorder %v845, 8.507059e+37
          %v847 = vand.u32 %v835, 2147483648
          %v848 = vor.u32 1.1754944e-38, %v847
          %v849 = vsel %vm846, %v848, %v844
          %v850 = vmul.f32 1.0, %v849
          %851 = vrot.lane.b32.xlu0 %v801, 64
          %v852 = vpop.permute.xlu0 %851
          %v854 = vadd.f32 %v828, %v852
          %856 = vrot.lane.b32.xlu0 %v854, 64
          %v857 = vpop.permute.xlu0 %856
          %v859 = vmul.f32 %v850, %v857
          %861 = vrot.lane.b32.xlu0 %v859, 64
          %v862 = vpop.permute.xlu0 %861
          %v864 = vadd.f32 %v830, %v862
          %v865 = vtanh.pop %v864
          %v866 = vsub.f32 1.0, %v850
          %868 = vrot.lane.b32.xlu0 %v865, 96
          %v869 = vpop.permute.xlu0 %868
          %v871 = vmul.f32 %v866, %v869
          %v872 = vmul.f32 %v850, 0.0
          %v873 = vadd.f32 %v871, %v872
          %875 = vrot.lane.b32.xlu0 %v873, 96
          %v876 = vpop.permute.xlu0 %875
          %v877 = vsel %vm806, %v876, 0
          %879 = vmatpush.msra.mxu0 0.0
          %880 = vmatpush.msra.mxu0 0.0
          %881 = vmatpush.msra.mxu0 0.0
          %882 = vmatpush.msra.mxu0 0.0
          %883 = vmatpush.msra.mxu0 0.0
          %884 = vmatpush.msra.mxu0 0.0
          %885 = vmatpush.msra.mxu0 0.0
          %886 = vmatpush.msra.mxu0 0.0
          %887 = vmatpush.msra.mxu0 0.0
          %888 = vmatpush.msra.mxu0 0.0
          %889 = vmatpush.msra.mxu0 0.0
          %890 = vmatpush.msra.mxu0 0.0
          %891 = vmatpush.msra.mxu0 %v805
          %892 = vmatpush.msra.mxu0 %v804
          %893 = vmatpush.msra.mxu0 %v803
          %894 = vmatpush.msra.mxu0 %v802
          %895 = vmatmul.f32.gmra.mxu0 %v877
          %v896 = vpop.f32.mrf.mxu0
          %v897 = vadd.f32 0.0, %v896
          %898 = vdwg.mxu0
          %v899 = vld [vmem:[#allocation2 + $0x8] sm:$0xff]
          %v900 = vadd.f32 %v899, %v897
          %v901 = vxor.u32 %v900, 2147483648
          %v902 = vmul.f32 %v901, 1.442695
          %v903 = vpow.pop %v902
          %v904 = vadd.f32 %v903, 1.0
          %v905 = vrcp.pop %v904
          %v906 = vmul.f32 %v904, %v905
          %v907 = vsub.f32 1.0, %v906
          %v908 = vmul.f32 %v905, %v907
          %v909 = vadd.f32 %v905, %v908
          %vm910 = vweird.f32 %v904
          %vm911 = vweird.f32 %v905
          %vm912 = vmor %vm910, %vm911
          %v913 = vsel %vm912, %v905, %v909
          %v914 = vand.u32 2147483647, %v904
          %vm915 = vcmp.eq.f32.partialorder %v914, 8.507059e+37
          %v916 = vand.u32 %v904, 2147483648
          %v917 = vor.u32 1.1754944e-38, %v916
          %v918 = vsel %vm915, %v917, %v913
          %v919 = vmul.f32 1.0, %v918
          %v920 = vadd.f32 %v897, %v852
          %922 = vrot.lane.b32.xlu0 %v920, 64
          %v923 = vpop.permute.xlu0 %922
          %v925 = vmul.f32 %v919, %v923
          %927 = vrot.lane.b32.xlu0 %v925, 64
          %v928 = vpop.permute.xlu0 %927
          %v930 = vadd.f32 %v899, %v928
          %v931 = vtanh.pop %v930
          %v932 = vsub.f32 1.0, %v919
          %934 = vrot.lane.b32.xlu0 %v931, 96
          %v935 = vpop.permute.xlu0 %934
          %v937 = vmul.f32 %v932, %v935
          %v938 = vmul.f32 %v919, %v873
          %v939 = vadd.f32 %v937, %v938
          %941 = vrot.lane.b32.xlu0 %v939, 96
          %v942 = vpop.permute.xlu0 %941
          %v943 = vsel %vm806, %v942, 0
          %945 = vmatpush.msra.mxu0 0.0
          %946 = vmatpush.msra.mxu0 0.0
          %947 = vmatpush.msra.mxu0 0.0
          %948 = vmatpush.msra.mxu0 0.0
          %949 = vmatpush.msra.mxu0 0.0
          %950 = vmatpush.msra.mxu0 0.0
          %951 = vmatpush.msra.mxu0 0.0
          %952 = vmatpush.msra.mxu0 0.0
          %953 = vmatpush.msra.mxu0 0.0
          %954 = vmatpush.msra.mxu0 0.0
          %955 = vmatpush.msra.mxu0 0.0
          %956 = vmatpush.msra.mxu0 0.0
          %957 = vmatpush.msra.mxu0 %v805
          %958 = vmatpush.msra.mxu0 %v804
          %959 = vmatpush.msra.mxu0 %v803
          %960 = vmatpush.msra.mxu0 %v802
          %961 = vmatmul.f32.gmra.mxu0 %v943
          %v962 = vpop.f32.mrf.mxu0
          %v963 = vadd.f32 0.0, %v962
          %964 = vdwg.mxu0
          %v965 = vld [vmem:[#allocation2 + $0x10] sm:$0xff]
          %v966 = vadd.f32 %v965, %v963
          %v967 = vxor.u32 %v966, 2147483648
          %v968 = vmul.f32 %v967, 1.442695
          %v969 = vpow.pop %v968
          %v970 = vadd.f32 %v969, 1.0
          %v971 = vrcp.pop %v970
          %v972 = vmul.f32 %v970, %v971
          %v973 = vsub.f32 1.0, %v972
          %v974 = vmul.f32 %v971, %v973
          %v975 = vadd.f32 %v971, %v974
          %vm976 = vweird.f32 %v970
          %vm977 = vweird.f32 %v971
          %vm978 = vmor %vm976, %vm977
          %v979 = vsel %vm978, %v971, %v975
          %v980 = vand.u32 2147483647, %v970
          %vm981 = vcmp.eq.f32.partialorder %v980, 8.507059e+37
          %v982 = vand.u32 %v970, 2147483648
          %v983 = vor.u32 1.1754944e-38, %v982
          %v984 = vsel %vm981, %v983, %v979
          %v985 = vmul.f32 1.0, %v984
          %v986 = vadd.f32 %v963, %v852
          %988 = vrot.lane.b32.xlu0 %v986, 64
          %v989 = vpop.permute.xlu0 %988
          %v991 = vmul.f32 %v985, %v989
          %993 = vrot.lane.b32.xlu0 %v991, 64
          %v994 = vpop.permute.xlu0 %993
          %v996 = vadd.f32 %v965, %v994
          %v997 = vtanh.pop %v996
          %v998 = vsub.f32 1.0, %v985
          %1000 = vrot.lane.b32.xlu0 %v997, 96
          %v1001 = vpop.permute.xlu0 %1000
          %v1003 = vmul.f32 %v998, %v1001
          %v1004 = vmul.f32 %v985, %v939
          %v1005 = vadd.f32 %v1003, %v1004
          %1007 = vrot.lane.b32.xlu0 %v1005, 96
          %v1008 = vpop.permute.xlu0 %1007
          %v1009 = vsel %vm806, %v1008, 0
          %1011 = vmatpush.msra.mxu0 0.0
          %1012 = vmatpush.msra.mxu0 0.0
          %1013 = vmatpush.msra.mxu0 0.0
          %1014 = vmatpush.msra.mxu0 0.0
          %1015 = vmatpush.msra.mxu0 0.0
          %1016 = vmatpush.msra.mxu0 0.0
          %1017 = vmatpush.msra.mxu0 0.0
          %1018 = vmatpush.msra.mxu0 0.0
          %1019 = vmatpush.msra.mxu0 0.0
          %1020 = vmatpush.msra.mxu0 0.0
          %1021 = vmatpush.msra.mxu0 0.0
          %1022 = vmatpush.msra.mxu0 0.0
          %1023 = vmatpush.msra.mxu0 %v805
          %1024 = vmatpush.msra.mxu0 %v804
          %1025 = vmatpush.msra.mxu0 %v803
          %1026 = vmatpush.msra.mxu0 %v802
          %1027 = vmatmul.f32.gmra.mxu0 %v1009
          %v1028 = vpop.f32.mrf.mxu0
          %v1029 = vadd.f32 0.0, %v1028
          %1030 = vdwg.mxu0
          %v1031 = vld [vmem:[#allocation2 + $0x18] sm:$0xff]
          %v1032 = vadd.f32 %v1031, %v1029
          %v1033 = vxor.u32 %v1032, 2147483648
          %v1034 = vmul.f32 %v1033, 1.442695
          %v1035 = vpow.pop %v1034
          %v1036 = vadd.f32 %v1035, 1.0
          %v1037 = vrcp.pop %v1036
          %v1038 = vmul.f32 %v1036, %v1037
          %v1039 = vsub.f32 1.0, %v1038
          %v1040 = vmul.f32 %v1037, %v1039
          %v1041 = vadd.f32 %v1037, %v1040
          %vm1042 = vweird.f32 %v1036
          %vm1043 = vweird.f32 %v1037
          %vm1044 = vmor %vm1042, %vm1043
          %v1045 = vsel %vm1044, %v1037, %v1041
          %v1046 = vand.u32 2147483647, %v1036
          %vm1047 = vcmp.eq.f32.partialorder %v1046, 8.507059e+37
          %v1048 = vand.u32 %v1036, 2147483648
          %v1049 = vor.u32 1.1754944e-38, %v1048
          %v1050 = vsel %vm1047, %v1049, %v1045
          %v1051 = vmul.f32 1.0, %v1050
          %v1052 = vadd.f32 %v1029, %v852
          %1054 = vrot.lane.b32.xlu0 %v1052, 64
          %v1055 = vpop.permute.xlu0 %1054
          %v1057 = vmul.f32 %v1051, %v1055
          %1059 = vrot.lane.b32.xlu0 %v1057, 64
          %v1060 = vpop.permute.xlu0 %1059
          %v1062 = vadd.f32 %v1031, %v1060
          %v1063 = vtanh.pop %v1062
          %v1064 = vsub.f32 1.0, %v1051
          %1066 = vrot.lane.b32.xlu0 %v1063, 96
          %v1067 = vpop.permute.xlu0 %1066
          %v1069 = vmul.f32 %v1064, %v1067
          %v1070 = vmul.f32 %v1051, %v1005
          %v1071 = vadd.f32 %v1069, %v1070
          %1073 = vrot.lane.b32.xlu0 %v1071, 96
          %v1074 = vpop.permute.xlu0 %1073
          %v1075 = vsel %vm806, %v1074, 0
          %1077 = vmatpush.msra.mxu0 0.0
          %1078 = vmatpush.msra.mxu0 0.0
          %1079 = vmatpush.msra.mxu0 0.0
          %1080 = vmatpush.msra.mxu0 0.0
          %1081 = vmatpush.msra.mxu0 0.0
          %1082 = vmatpush.msra.mxu0 0.0
          %1083 = vmatpush.msra.mxu0 0.0
          %1084 = vmatpush.msra.mxu0 0.0
          %1085 = vmatpush.msra.mxu0 0.0
          %1086 = vmatpush.msra.mxu0 0.0
          %1087 = vmatpush.msra.mxu0 0.0
          %1088 = vmatpush.msra.mxu0 0.0
          %1089 = vmatpush.msra.mxu0 %v805
          %1090 = vmatpush.msra.mxu0 %v804
          %1091 = vmatpush.msra.mxu0 %v803
          %1092 = vmatpush.msra.mxu0 %v802
          %1093 = vmatmul.f32.gmra.mxu0 %v1075
          %v1094 = vpop.f32.mrf.mxu0
          %v1095 = vadd.f32 0.0, %v1094
          %1096 = vdwg.mxu0
          %v1097 = vld [vmem:[#allocation2 + $0x20] sm:$0xff]
          %v1098 = vadd.f32 %v1097, %v1095
          %v1099 = vxor.u32 %v1098, 2147483648
          %v1100 = vmul.f32 %v1099, 1.442695
          %v1101 = vpow.pop %v1100
          %v1102 = vadd.f32 %v1101, 1.0
          %v1103 = vrcp.pop %v1102
          %v1104 = vmul.f32 %v1102, %v1103
          %v1105 = vsub.f32 1.0, %v1104
          %v1106 = vmul.f32 %v1103, %v1105
          %v1107 = vadd.f32 %v1103, %v1106
          %vm1108 = vweird.f32 %v1102
          %vm1109 = vweird.f32 %v1103
          %vm1110 = vmor %vm1108, %vm1109
          %v1111 = vsel %vm1110, %v1103, %v1107
          %v1112 = vand.u32 2147483647, %v1102
          %vm1113 = vcmp.eq.f32.partialorder %v1112, 8.507059e+37
          %v1114 = vand.u32 %v1102, 2147483648
          %v1115 = vor.u32 1.1754944e-38, %v1114
          %v1116 = vsel %vm1113, %v1115, %v1111
          %v1117 = vmul.f32 1.0, %v1116
          %v1118 = vadd.f32 %v1095, %v852
          %1120 = vrot.lane.b32.xlu0 %v1118, 64
          %v1121 = vpop.permute.xlu0 %1120
          %v1123 = vmul.f32 %v1117, %v1121
          %1125 = vrot.lane.b32.xlu0 %v1123, 64
          %v1126 = vpop.permute.xlu0 %1125
          %v1128 = vadd.f32 %v1097, %v1126
          %v1129 = vtanh.pop %v1128
          %v1130 = vsub.f32 1.0, %v1117
          %1132 = vrot.lane.b32.xlu0 %v1129, 96
          %v1133 = vpop.permute.xlu0 %1132
          %v1135 = vmul.f32 %v1130, %v1133
          %v1136 = vmul.f32 %v1117, %v1071
          %v1137 = vadd.f32 %v1135, %v1136
          %1139 = vrot.lane.b32.xlu0 %v1137, 96
          %v1140 = vpop.permute.xlu0 %1139
          %v1141 = vsel %vm806, %v1140, 0
          %1143 = vmatpush.msra.mxu0 0.0
          %1144 = vmatpush.msra.mxu0 0.0
          %1145 = vmatpush.msra.mxu0 0.0
          %1146 = vmatpush.msra.mxu0 0.0
          %1147 = vmatpush.msra.mxu0 0.0
          %1148 = vmatpush.msra.mxu0 0.0
          %1149 = vmatpush.msra.mxu0 0.0
          %1150 = vmatpush.msra.mxu0 0.0
          %1151 = vmatpush.msra.mxu0 0.0
          %1152 = vmatpush.msra.mxu0 0.0
          %1153 = vmatpush.msra.mxu0 0.0
          %1154 = vmatpush.msra.mxu0 0.0
          %1155 = vmatpush.msra.mxu0 %v805
          %1156 = vmatpush.msra.mxu0 %v804
          %1157 = vmatpush.msra.mxu0 %v803
          %1158 = vmatpush.msra.mxu0 %v802
          %1159 = vmatmul.f32.gmra.mxu0 %v1141
          %v1160 = vpop.f32.mrf.mxu0
          %v1161 = vadd.f32 0.0, %v1160
          %1162 = vdwg.mxu0
          %v1163 = vld [vmem:[#allocation2 + $0x28] sm:$0xff]
          %v1164 = vadd.f32 %v1163, %v1161
          %v1165 = vxor.u32 %v1164, 2147483648
          %v1166 = vmul.f32 %v1165, 1.442695
          %v1167 = vpow.pop %v1166
          %v1168 = vadd.f32 %v1167, 1.0
          %v1169 = vrcp.pop %v1168
          %v1170 = vmul.f32 %v1168, %v1169
          %v1171 = vsub.f32 1.0, %v1170
          %v1172 = vmul.f32 %v1169, %v1171
          %v1173 = vadd.f32 %v1169, %v1172
          %vm1174 = vweird.f32 %v1168
          %vm1175 = vweird.f32 %v1169
          %vm1176 = vmor %vm1174, %vm1175
          %v1177 = vsel %vm1176, %v1169, %v1173
          %v1178 = vand.u32 2147483647, %v1168
          %vm1179 = vcmp.eq.f32.partialorder %v1178, 8.507059e+37
          %v1180 = vand.u32 %v1168, 2147483648
          %v1181 = vor.u32 1.1754944e-38, %v1180
          %v1182 = vsel %vm1179, %v1181, %v1177
          %v1183 = vmul.f32 1.0, %v1182
          %v1184 = vadd.f32 %v1161, %v852
          %1186 = vrot.lane.b32.xlu0 %v1184, 64
          %v1187 = vpop.permute.xlu0 %1186
          %v1189 = vmul.f32 %v1183, %v1187
          %1191 = vrot.lane.b32.xlu0 %v1189, 64
          %v1192 = vpop.permute.xlu0 %1191
          %v1194 = vadd.f32 %v1163, %v1192
          %v1195 = vtanh.pop %v1194
          %v1196 = vsub.f32 1.0, %v1183
          %1198 = vrot.lane.b32.xlu0 %v1195, 96
          %v1199 = vpop.permute.xlu0 %1198
          %v1201 = vmul.f32 %v1196, %v1199
          %v1202 = vmul.f32 %v1183, %v1137
          %v1203 = vadd.f32 %v1201, %v1202
          %1205 = vrot.lane.b32.xlu0 %v1203, 96
          %v1206 = vpop.permute.xlu0 %1205
          %v1207 = vsel %vm806, %v1206, 0
          %1209 = vmatpush.msra.mxu0 0.0
          %1210 = vmatpush.msra.mxu0 0.0
          %1211 = vmatpush.msra.mxu0 0.0
          %1212 = vmatpush.msra.mxu0 0.0
          %1213 = vmatpush.msra.mxu0 0.0
          %1214 = vmatpush.msra.mxu0 0.0
          %1215 = vmatpush.msra.mxu0 0.0
          %1216 = vmatpush.msra.mxu0 0.0
          %1217 = vmatpush.msra.mxu0 0.0
          %1218 = vmatpush.msra.mxu0 0.0
          %1219 = vmatpush.msra.mxu0 0.0
          %1220 = vmatpush.msra.mxu0 0.0
          %1221 = vmatpush.msra.mxu0 %v805
          %1222 = vmatpush.msra.mxu0 %v804
          %1223 = vmatpush.msra.mxu0 %v803
          %1224 = vmatpush.msra.mxu0 %v802
          %1225 = vmatmul.f32.gmra.mxu0 %v1207
          %v1226 = vpop.f32.mrf.mxu0
          %v1227 = vadd.f32 0.0, %v1226
          %1228 = vdwg.mxu0
          %v1229 = vld [vmem:[#allocation2 + $0x30] sm:$0xff]
          %v1230 = vadd.f32 %v1229, %v1227
          %v1231 = vxor.u32 %v1230, 2147483648
          %v1232 = vmul.f32 %v1231, 1.442695
          %v1233 = vpow.pop %v1232
          %v1234 = vadd.f32 %v1233, 1.0
          %v1235 = vrcp.pop %v1234
          %v1236 = vmul.f32 %v1234, %v1235
          %v1237 = vsub.f32 1.0, %v1236
          %v1238 = vmul.f32 %v1235, %v1237
          %v1239 = vadd.f32 %v1235, %v1238
          %vm1240 = vweird.f32 %v1234
          %vm1241 = vweird.f32 %v1235
          %vm1242 = vmor %vm1240, %vm1241
          %v1243 = vsel %vm1242, %v1235, %v1239
          %v1244 = vand.u32 2147483647, %v1234
          %vm1245 = vcmp.eq.f32.partialorder %v1244, 8.507059e+37
          %v1246 = vand.u32 %v1234, 2147483648
          %v1247 = vor.u32 1.1754944e-38, %v1246
          %v1248 = vsel %vm1245, %v1247, %v1243
          %v1249 = vmul.f32 1.0, %v1248
          %v1250 = vadd.f32 %v1227, %v852
          %1252 = vrot.lane.b32.xlu0 %v1250, 64
          %v1253 = vpop.permute.xlu0 %1252
          %v1255 = vmul.f32 %v1249, %v1253
          %1257 = vrot.lane.b32.xlu0 %v1255, 64
          %v1258 = vpop.permute.xlu0 %1257
          %v1260 = vadd.f32 %v1229, %v1258
          %v1261 = vtanh.pop %v1260
          %v1262 = vsub.f32 1.0, %v1249
          %1264 = vrot.lane.b32.xlu0 %v1261, 96
          %v1265 = vpop.permute.xlu0 %1264
          %v1267 = vmul.f32 %v1262, %v1265
          %v1268 = vmul.f32 %v1249, %v1203
          %v1269 = vadd.f32 %v1267, %v1268
          %1271 = vrot.lane.b32.xlu0 %v1269, 96
          %v1272 = vpop.permute.xlu0 %1271
          %v1273 = vsel %vm806, %v1272, 0
          %1275 = vmatpush.msra.mxu0 0.0
          %1276 = vmatpush.msra.mxu0 0.0
          %1277 = vmatpush.msra.mxu0 0.0
          %1278 = vmatpush.msra.mxu0 0.0
          %1279 = vmatpush.msra.mxu0 0.0
          %1280 = vmatpush.msra.mxu0 0.0
          %1281 = vmatpush.msra.mxu0 0.0
          %1282 = vmatpush.msra.mxu0 0.0
          %1283 = vmatpush.msra.mxu0 0.0
          %1284 = vmatpush.msra.mxu0 0.0
          %1285 = vmatpush.msra.mxu0 0.0
          %1286 = vmatpush.msra.mxu0 0.0
          %1287 = vmatpush.msra.mxu0 %v805
          %1288 = vmatpush.msra.mxu0 %v804
          %1289 = vmatpush.msra.mxu0 %v803
          %1290 = vmatpush.msra.mxu0 %v802
          %1291 = vmatmul.f32.gmra.mxu0 %v1273
          %v1292 = vpop.f32.mrf.mxu0
          %v1293 = vadd.f32 0.0, %v1292
          %1294 = vdwg.mxu0
          %v1295 = vld [vmem:[#allocation2 + $0x38] sm:$0xff]
          %v1296 = vadd.f32 %v1295, %v1293
          %v1297 = vxor.u32 %v1296, 2147483648
          %v1298 = vmul.f32 %v1297, 1.442695
          %v1299 = vpow.pop %v1298
          %v1300 = vadd.f32 %v1299, 1.0
          %v1301 = vrcp.pop %v1300
          %v1302 = vmul.f32 %v1300, %v1301
          %v1303 = vsub.f32 1.0, %v1302
          %v1304 = vmul.f32 %v1301, %v1303
          %v1305 = vadd.f32 %v1301, %v1304
          %vm1306 = vweird.f32 %v1300
          %vm1307 = vweird.f32 %v1301
          %vm1308 = vmor %vm1306, %vm1307
          %v1309 = vsel %vm1308, %v1301, %v1305
          %v1310 = vand.u32 2147483647, %v1300
          %vm1311 = vcmp.eq.f32.partialorder %v1310, 8.507059e+37
          %v1312 = vand.u32 %v1300, 2147483648
          %v1313 = vor.u32 1.1754944e-38, %v1312
          %v1314 = vsel %vm1311, %v1313, %v1309
          %v1315 = vmul.f32 1.0, %v1314
          %v1316 = vadd.f32 %v1293, %v852
          %1318 = vrot.lane.b32.xlu0 %v1316, 64
          %v1319 = vpop.permute.xlu0 %1318
          %v1321 = vmul.f32 %v1315, %v1319
          %1323 = vrot.lane.b32.xlu0 %v1321, 64
          %v1324 = vpop.permute.xlu0 %1323
          %v1326 = vadd.f32 %v1295, %v1324
          %v1327 = vtanh.pop %v1326
          %v1328 = vsub.f32 1.0, %v1315
          %1330 = vrot.lane.b32.xlu0 %v1327, 96
          %v1331 = vpop.permute.xlu0 %1330
          %v1333 = vmul.f32 %v1328, %v1331
          %v1334 = vmul.f32 %v1315, %v1269
          %v1335 = vadd.f32 %v1333, %v1334
          %v1336 = vld [vmem:[%s1] sm:$0xff]
          %v1337 = vld [vmem:[%s1 + $0x8] sm:$0xff]
          %v1338 = vld [vmem:[%s1 + $0x10] sm:$0xff]
          %v1339 = vld [vmem:[%s1 + $0x18] sm:$0xff]
          %v1340 = vld [vmem:[%s1 + $0x20] sm:$0xff]
          %v1341 = vld [vmem:[%s1 + $0x28] sm:$0xff]
          %v1342 = vld [vmem:[%s1 + $0x30] sm:$0xff]
          %v1343 = vld [vmem:[%s1 + $0x38] sm:$0xff]
          %v1344 = vld [vmem:[#allocation7] sm:$0xff]
          %v1345 = vld [vmem:[#allocation7 + $0x8] sm:$0xff]
          %v1347 = vsel %vm724, %v1336, 0
          %v1350 = vsel %vm724, %v1337, 0
          %v1353 = vsel %vm724, %v1338, 0
          %v1356 = vsel %vm724, %v1339, 0
          %v1359 = vsel %vm724, %v1340, 0
          %v1362 = vsel %vm724, %v1341, 0
          %v1365 = vsel %vm724, %v1342, 0
          %v1368 = vsel %vm724, %v1343, 0
          %1370 = vmatpush.msra.mxu0 0.0
          %1371 = vmatpush.msra.mxu0 0.0
          %1372 = vmatpush.msra.mxu0 0.0
          %1373 = vmatpush.msra.mxu0 0.0
          %1374 = vmatpush.msra.mxu0 0.0
          %1375 = vmatpush.msra.mxu0 0.0
          %1376 = vmatpush.msra.mxu0 0.0
          %1377 = vmatpush.msra.mxu0 0.0
          %1378 = vmatpush.msra.mxu0 0.0
          %1379 = vmatpush.msra.mxu0 0.0
          %1380 = vmatpush.msra.mxu0 0.0
          %1381 = vmatpush.msra.mxu0 0.0
          %1382 = vmatpush.msra.mxu0 0.0
          %1383 = vmatpush.msra.mxu0 0.0
          %1384 = vmatpush.msra.mxu0 %v1345
          %1385 = vmatpush.msra.mxu0 %v1344
          %1386 = vmatmul.f32.gmra.mxu0 %v1347
          %v1387 = vpop.f32.mrf.mxu0
          %v1388 = vadd.f32 0.0, %v1387
          %1389 = vmatmul.f32.gmra.mxu0 %v1350
          %v1390 = vpop.f32.mrf.mxu0
          %v1391 = vadd.f32 0.0, %v1390
          %1392 = vmatmul.f32.gmra.mxu0 %v1353
          %v1393 = vpop.f32.mrf.mxu0
          %v1394 = vadd.f32 0.0, %v1393
          %1395 = vmatmul.f32.gmra.mxu0 %v1356
          %v1396 = vpop.f32.mrf.mxu0
          %v1397 = vadd.f32 0.0, %v1396
          %1398 = vmatmul.f32.gmra.mxu0 %v1359
          %v1399 = vpop.f32.mrf.mxu0
          %v1400 = vadd.f32 0.0, %v1399
          %1401 = vmatmul.f32.gmra.mxu0 %v1362
          %v1402 = vpop.f32.mrf.mxu0
          %v1403 = vadd.f32 0.0, %v1402
          %1404 = vmatmul.f32.gmra.mxu0 %v1365
          %v1405 = vpop.f32.mrf.mxu0
          %v1406 = vadd.f32 0.0, %v1405
          %1407 = vmatmul.f32.gmra.mxu0 %v1368
          %v1408 = vpop.f32.mrf.mxu0
          %v1409 = vadd.f32 0.0, %v1408
          %1410 = vdwg.mxu0
          %v1411 = vld [vmem:[#allocation9] sm:$0xff]
          %v1412 = vld [vmem:[#allocation9 + $0x8] sm:$0xff]
          %v1413 = vld [vmem:[#allocation9 + $0x10] sm:$0xff]
          %v1414 = vld [vmem:[#allocation9 + $0x18] sm:$0xff]
          %1416 = vrot.lane.b32.xlu0 %v1335, 96
          %v1417 = vpop.permute.xlu0 %1416
          %v1418 = vsel %vm806, %v1417, 0
          %1420 = vmatpush.msra.mxu0 0.0
          %1421 = vmatpush.msra.mxu0 0.0
          %1422 = vmatpush.msra.mxu0 0.0
          %1423 = vmatpush.msra.mxu0 0.0
          %1424 = vmatpush.msra.mxu0 0.0
          %1425 = vmatpush.msra.mxu0 0.0
          %1426 = vmatpush.msra.mxu0 0.0
          %1427 = vmatpush.msra.mxu0 0.0
          %1428 = vmatpush.msra.mxu0 0.0
          %1429 = vmatpush.msra.mxu0 0.0
          %1430 = vmatpush.msra.mxu0 0.0
          %1431 = vmatpush.msra.mxu0 0.0
          %1432 = vmatpush.msra.mxu0 %v1414
          %1433 = vmatpush.msra.mxu0 %v1413
          %1434 = vmatpush.msra.mxu0 %v1412
          %1435 = vmatpush.msra.mxu0 %v1411
          %1436 = vmatmul.f32.gmra.mxu0 %v1418
          %v1437 = vpop.f32.mrf.mxu0
          %v1438 = vadd.f32 0.0, %v1437
          %1439 = vdwg.mxu0
          %v1441 = vrot.slane %v1438, 1
          %v1442 = vrot.slane %v1438, 2
          %v1443 = vrot.slane %v1438, 3
          %v1444 = vrot.slane %v1438, 4
          %v1445 = vrot.slane %v1438, 5
          %v1446 = vrot.slane %v1438, 6
          %v1447 = vrot.slane %v1438, 7
          %v1448 = vperm.slane %v1438, 0
          %v1449 = vperm.slane %v1441, 0
          %v1450 = vperm.slane %v1442, 0
          %v1451 = vperm.slane %v1443, 0
          %v1452 = vperm.slane %v1444, 0
          %v1453 = vperm.slane %v1445, 0
          %v1454 = vperm.slane %v1446, 0
          %v1455 = vperm.slane %v1447, 0
          %v1464 = vadd.f32 %v1388, %v1448
          %v1465 = vadd.f32 %v1391, %v1449
          %v1466 = vadd.f32 %v1394, %v1450
          %v1467 = vadd.f32 %v1397, %v1451
          %v1468 = vadd.f32 %v1400, %v1452
          %v1469 = vadd.f32 %v1403, %v1453
          %v1470 = vadd.f32 %v1406, %v1454
          %v1471 = vadd.f32 %v1409, %v1455
          %v1472 = vld [vmem:[%s8] sm:$0x1]
          %v1474 = vperm.slane %v1472, 0
          %v1476 = vadd.f32 %v1464, %v1474
          %v1477 = vadd.f32 %v1465, %v1474
          %v1478 = vadd.f32 %v1466, %v1474
          %v1479 = vadd.f32 %v1467, %v1474
          %v1480 = vadd.f32 %v1468, %v1474
          %v1481 = vadd.f32 %v1469, %v1474
          %v1482 = vadd.f32 %v1470, %v1474
          %v1483 = vadd.f32 %v1471, %v1474
          %v1484 = vmax.f32 %v1476, 0.0
          %v1485 = vmax.f32 %v1477, 0.0
          %v1486 = vmax.f32 %v1478, 0.0
          %v1487 = vmax.f32 %v1479, 0.0
          %v1488 = vmax.f32 %v1480, 0.0
          %v1489 = vmax.f32 %v1481, 0.0
          %v1490 = vmax.f32 %v1482, 0.0
          %v1491 = vmax.f32 %v1483, 0.0
          %v1492 = vld [vmem:[%s9] sm:$0x1]
          %v1494 = vperm.slane %v1492, 0
          %v1496 = vmul.f32 %v1484, %v1494
          %v1497 = vmul.f32 %v1485, %v1494
          %v1498 = vmul.f32 %v1486, %v1494
          %v1499 = vmul.f32 %v1487, %v1494
          %v1500 = vmul.f32 %v1488, %v1494
          %v1501 = vmul.f32 %v1489, %v1494
          %v1502 = vmul.f32 %v1490, %v1494
          %v1503 = vmul.f32 %v1491, %v1494
          %v1504 = vsel %vm806, %v1496, 0.0
          %1505 = vadd.xlane.f32.xlu0 %v1504
          %v1506 = vpop.xlane.xlu0 %1505
          %v1507 = vsel %vm806, %v1497, 0.0
          %1508 = vadd.xlane.f32.xlu0 %v1507
          %v1509 = vpop.xlane.xlu0 %1508
          %v1510 = vsel %vm806, %v1498, 0.0
          %1511 = vadd.xlane.f32.xlu0 %v1510
          %v1512 = vpop.xlane.xlu0 %1511
          %v1513 = vsel %vm806, %v1499, 0.0
          %1514 = vadd.xlane.f32.xlu0 %v1513
          %v1515 = vpop.xlane.xlu0 %1514
          %v1516 = vsel %vm806, %v1500, 0.0
          %1517 = vadd.xlane.f32.xlu0 %v1516
          %v1518 = vpop.xlane.xlu0 %1517
          %v1519 = vsel %vm806, %v1501, 0.0
          %1520 = vadd.xlane.f32.xlu0 %v1519
          %v1521 = vpop.xlane.xlu0 %1520
          %v1522 = vsel %vm806, %v1502, 0.0
          %1523 = vadd.xlane.f32.xlu0 %v1522
          %v1524 = vpop.xlane.xlu0 %1523
          %v1525 = vsel %vm806, %v1503, 0.0
          %1526 = vadd.xlane.f32.xlu0 %v1525
          %v1527 = vpop.xlane.xlu0 %1526
          %v1536 = vlaneseq
          %v1537 = vand.u32 %v1536, 127
          %v1538 = vperm.slane %v1506, %v1537
          %v1539 = vperm.slane %v1509, %v1537
          %v1540 = vperm.slane %v1512, %v1537
          %v1541 = vperm.slane %v1515, %v1537
          %v1542 = vperm.slane %v1518, %v1537
          %v1543 = vperm.slane %v1521, %v1537
          %v1544 = vperm.slane %v1524, %v1537
          %v1545 = vperm.slane %v1527, %v1537
          %vm1546 = vcmask 1041409
          %v1547 = vsel %vm1546, %v1539, %v1538
          %vm1548 = vcmask 1042434
          %v1549 = vsel %vm1548, %v1540, %v1547
          %vm1550 = vcmask 1043459
          %v1551 = vsel %vm1550, %v1541, %v1549
          %vm1552 = vcmask 1044484
          %v1553 = vsel %vm1552, %v1542, %v1551
          %vm1554 = vcmask 1045509
          %v1555 = vsel %vm1554, %v1543, %v1553
          %vm1556 = vcmask 1046534
          %v1557 = vsel %vm1556, %v1544, %v1555
          %vm1558 = vcmask 1047559
          %v1559 = vsel %vm1558, %v1545, %v1557
          %vm1561 = vcmask 64512
          %v1562 = vsel %vm1561, %v1559, -inf
          %1563 = vmax.xlane.f32.xlu0 %v1562
          %v1564 = vpop.xlane.xlu0 %1563
          %v1566 = vperm.slane %v1564, 0
          %v1567 = vperm.slane %v1564, 1
          %v1568 = vperm.slane %v1564, 2
          %v1569 = vperm.slane %v1564, 3
          %v1570 = vperm.slane %v1564, 4
          %v1571 = vperm.slane %v1564, 5
          %v1572 = vperm.slane %v1564, 6
          %v1573 = vperm.slane %v1564, 7
          %v1582 = vsub.f32 %v1506, %v1566
          %v1583 = vsub.f32 %v1509, %v1567
          %v1584 = vsub.f32 %v1512, %v1568
          %v1585 = vsub.f32 %v1515, %v1569
          %v1586 = vsub.f32 %v1518, %v1570
          %v1587 = vsub.f32 %v1521, %v1571
          %v1588 = vsub.f32 %v1524, %v1572
          %v1589 = vsub.f32 %v1527, %v1573
          %v1590 = vmul.f32 %v1582, 1.442695
          %v1591 = vpow.pop %v1590
          %v1592 = vmul.f32 %v1583, 1.442695
          %v1593 = vpow.pop %v1592
          %v1594 = vmul.f32 %v1584, 1.442695
          %v1595 = vpow.pop %v1594
          %v1596 = vmul.f32 %v1585, 1.442695
          %v1597 = vpow.pop %v1596
          %v1598 = vmul.f32 %v1586, 1.442695
          %v1599 = vpow.pop %v1598
          %v1600 = vmul.f32 %v1587, 1.442695
          %v1601 = vpow.pop %v1600
          %v1602 = vmul.f32 %v1588, 1.442695
          %v1603 = vpow.pop %v1602
          %v1604 = vmul.f32 %v1589, 1.442695
          %v1605 = vpow.pop %v1604
          %1614 = vset.pattern.permute.xlu0 0
          %1615 = vperm.xlu0 %1614, %v1591
          %v1616 = vpop.permute.xlu0 %1615
          %1617 = vset.pattern.permute.xlu0 0
          %1618 = vperm.xlu0 %1617, %v1593
          %v1619 = vpop.permute.xlu0 %1618
          %1620 = vset.pattern.permute.xlu0 0
          %1621 = vperm.xlu0 %1620, %v1595
          %v1622 = vpop.permute.xlu0 %1621
          %1623 = vset.pattern.permute.xlu0 0
          %1624 = vperm.xlu0 %1623, %v1597
          %v1625 = vpop.permute.xlu0 %1624
          %1626 = vset.pattern.permute.xlu0 0
          %1627 = vperm.xlu0 %1626, %v1599
          %v1628 = vpop.permute.xlu0 %1627
          %1629 = vset.pattern.permute.xlu0 0
          %1630 = vperm.xlu0 %1629, %v1601
          %v1631 = vpop.permute.xlu0 %1630
          %1632 = vset.pattern.permute.xlu0 0
          %1633 = vperm.xlu0 %1632, %v1603
          %v1634 = vpop.permute.xlu0 %1633
          %1635 = vset.pattern.permute.xlu0 0
          %1636 = vperm.xlu0 %1635, %v1605
          %v1637 = vpop.permute.xlu0 %1636
          %v1638 = vperm.slane %v1616, %v1537
          %v1639 = vperm.slane %v1619, %v1537
          %v1640 = vperm.slane %v1622, %v1537
          %v1641 = vperm.slane %v1625, %v1537
          %v1642 = vperm.slane %v1628, %v1537
          %v1643 = vperm.slane %v1631, %v1537
          %v1644 = vperm.slane %v1634, %v1537
          %v1645 = vperm.slane %v1637, %v1537
          %v1646 = vsel %vm1546, %v1639, %v1638
          %v1647 = vsel %vm1548, %v1640, %v1646
          %v1648 = vsel %vm1550, %v1641, %v1647
          %v1649 = vsel %vm1552, %v1642, %v1648
          %v1650 = vsel %vm1554, %v1643, %v1649
          %v1651 = vsel %vm1556, %v1644, %v1650
          %v1652 = vsel %vm1558, %v1645, %v1651
          %v1654 = vsel %vm1561, %v1652, 0.0
          %1655 = vadd.xlane.f32.xlu0 %v1654
          %v1656 = vpop.xlane.xlu0 %1655
          %v1658 = vperm.slane %v1656, 0
          %v1659 = vperm.slane %v1656, 1
          %v1660 = vperm.slane %v1656, 2
          %v1661 = vperm.slane %v1656, 3
          %v1662 = vperm.slane %v1656, 4
          %v1663 = vperm.slane %v1656, 5
          %v1664 = vperm.slane %v1656, 6
          %v1665 = vperm.slane %v1656, 7
          %v1674 = vrcp.pop %v1658
          %v1675 = vmul.f32 %v1658, %v1674
          %v1676 = vsub.f32 1.0, %v1675
          %v1677 = vmul.f32 %v1674, %v1676
          %v1678 = vadd.f32 %v1674, %v1677
          %vm1679 = vweird.f32 %v1658
          %vm1680 = vweird.f32 %v1674
          %vm1681 = vmor %vm1679, %vm1680
          %v1682 = vsel %vm1681, %v1674, %v1678
          %v1683 = vand.u32 2147483647, %v1658
          %vm1684 = vcmp.eq.f32.partialorder %v1683, 8.507059e+37
          %v1685 = vand.u32 %v1658, 2147483648
          %v1686 = vor.u32 1.1754944e-38, %v1685
          %v1687 = vsel %vm1684, %v1686, %v1682
          %v1688 = vmul.f32 %v1591, %v1687
          %v1689 = vrcp.pop %v1659
          %v1690 = vmul.f32 %v1659, %v1689
          %v1691 = vsub.f32 1.0, %v1690
          %v1692 = vmul.f32 %v1689, %v1691
          %v1693 = vadd.f32 %v1689, %v1692
          %vm1694 = vweird.f32 %v1659
          %vm1695 = vweird.f32 %v1689
          %vm1696 = vmor %vm1694, %vm1695
          %v1697 = vsel %vm1696, %v1689, %v1693
          %v1698 = vand.u32 2147483647, %v1659
          %vm1699 = vcmp.eq.f32.partialorder %v1698, 8.507059e+37
          %v1700 = vand.u32 %v1659, 2147483648
          %v1701 = vor.u32 1.1754944e-38, %v1700
          %v1702 = vsel %vm1699, %v1701, %v1697
          %v1703 = vmul.f32 %v1593, %v1702
          %v1704 = vrcp.pop %v1660
          %v1705 = vmul.f32 %v1660, %v1704
          %v1706 = vsub.f32 1.0, %v1705
          %v1707 = vmul.f32 %v1704, %v1706
          %v1708 = vadd.f32 %v1704, %v1707
          %vm1709 = vweird.f32 %v1660
          %vm1710 = vweird.f32 %v1704
          %vm1711 = vmor %vm1709, %vm1710
          %v1712 = vsel %vm1711, %v1704, %v1708
          %v1713 = vand.u32 2147483647, %v1660
          %vm1714 = vcmp.eq.f32.partialorder %v1713, 8.507059e+37
          %v1715 = vand.u32 %v1660, 2147483648
          %v1716 = vor.u32 1.1754944e-38, %v1715
          %v1717 = vsel %vm1714, %v1716, %v1712
          %v1718 = vmul.f32 %v1595, %v1717
          %v1719 = vrcp.pop %v1661
          %v1720 = vmul.f32 %v1661, %v1719
          %v1721 = vsub.f32 1.0, %v1720
          %v1722 = vmul.f32 %v1719, %v1721
          %v1723 = vadd.f32 %v1719, %v1722
          %vm1724 = vweird.f32 %v1661
          %vm1725 = vweird.f32 %v1719
          %vm1726 = vmor %vm1724, %vm1725
          %v1727 = vsel %vm1726, %v1719, %v1723
          %v1728 = vand.u32 2147483647, %v1661
          %vm1729 = vcmp.eq.f32.partialorder %v1728, 8.507059e+37
          %v1730 = vand.u32 %v1661, 2147483648
          %v1731 = vor.u32 1.1754944e-38, %v1730
          %v1732 = vsel %vm1729, %v1731, %v1727
          %v1733 = vmul.f32 %v1597, %v1732
          %v1734 = vrcp.pop %v1662
          %v1735 = vmul.f32 %v1662, %v1734
          %v1736 = vsub.f32 1.0, %v1735
          %v1737 = vmul.f32 %v1734, %v1736
          %v1738 = vadd.f32 %v1734, %v1737
          %vm1739 = vweird.f32 %v1662
          %vm1740 = vweird.f32 %v1734
          %vm1741 = vmor %vm1739, %vm1740
          %v1742 = vsel %vm1741, %v1734, %v1738
          %v1743 = vand.u32 2147483647, %v1662
          %vm1744 = vcmp.eq.f32.partialorder %v1743, 8.507059e+37
          %v1745 = vand.u32 %v1662, 2147483648
          %v1746 = vor.u32 1.1754944e-38, %v1745
          %v1747 = vsel %vm1744, %v1746, %v1742
          %v1748 = vmul.f32 %v1599, %v1747
          %v1749 = vrcp.pop %v1663
          %v1750 = vmul.f32 %v1663, %v1749
          %v1751 = vsub.f32 1.0, %v1750
          %v1752 = vmul.f32 %v1749, %v1751
          %v1753 = vadd.f32 %v1749, %v1752
          %vm1754 = vweird.f32 %v1663
          %vm1755 = vweird.f32 %v1749
          %vm1756 = vmor %vm1754, %vm1755
          %v1757 = vsel %vm1756, %v1749, %v1753
          %v1758 = vand.u32 2147483647, %v1663
          %vm1759 = vcmp.eq.f32.partialorder %v1758, 8.507059e+37
          %v1760 = vand.u32 %v1663, 2147483648
          %v1761 = vor.u32 1.1754944e-38, %v1760
          %v1762 = vsel %vm1759, %v1761, %v1757
          %v1763 = vmul.f32 %v1601, %v1762
          %v1764 = vrcp.pop %v1664
          %v1765 = vmul.f32 %v1664, %v1764
          %v1766 = vsub.f32 1.0, %v1765
          %v1767 = vmul.f32 %v1764, %v1766
          %v1768 = vadd.f32 %v1764, %v1767
          %vm1769 = vweird.f32 %v1664
          %vm1770 = vweird.f32 %v1764
          %vm1771 = vmor %vm1769, %vm1770
          %v1772 = vsel %vm1771, %v1764, %v1768
          %v1773 = vand.u32 2147483647, %v1664
          %vm1774 = vcmp.eq.f32.partialorder %v1773, 8.507059e+37
          %v1775 = vand.u32 %v1664, 2147483648
          %v1776 = vor.u32 1.1754944e-38, %v1775
          %v1777 = vsel %vm1774, %v1776, %v1772
          %v1778 = vmul.f32 %v1603, %v1777
          %v1779 = vrcp.pop %v1665
          %v1780 = vmul.f32 %v1665, %v1779
          %v1781 = vsub.f32 1.0, %v1780
          %v1782 = vmul.f32 %v1779, %v1781
          %v1783 = vadd.f32 %v1779, %v1782
          %vm1784 = vweird.f32 %v1665
          %vm1785 = vweird.f32 %v1779
          %vm1786 = vmor %vm1784, %vm1785
          %v1787 = vsel %vm1786, %v1779, %v1783
          %v1788 = vand.u32 2147483647, %v1665
          %vm1789 = vcmp.eq.f32.partialorder %v1788, 8.507059e+37
          %v1790 = vand.u32 %v1665, 2147483648
          %v1791 = vor.u32 1.1754944e-38, %v1790
          %v1792 = vsel %vm1789, %v1791, %v1787
          %v1793 = vmul.f32 %v1605, %v1792
          %1795 = vset.pattern.permute.xlu0 0
          %1796 = vperm.xlu0 %1795, %v1688
          %v1797 = vpop.permute.xlu0 %1796
          %v1798 = vperm.slane %v1797, %v1537
          %v1799 = vsel %vm1561, %v1798, 0
          %1801 = vmatpush.msra.mxu0 0.0
          %1802 = vmatpush.msra.mxu0 0.0
          %1803 = vmatpush.msra.mxu0 0.0
          %1804 = vmatpush.msra.mxu0 0.0
          %1805 = vmatpush.msra.mxu0 0.0
          %1806 = vmatpush.msra.mxu0 0.0
          %1807 = vmatpush.msra.mxu0 0.0
          %1808 = vmatpush.msra.mxu0 0.0
          %1809 = vmatpush.msra.mxu0 0.0
          %1810 = vmatpush.msra.mxu0 0.0
          %1811 = vmatpush.msra.mxu0 0.0
          %1812 = vmatpush.msra.mxu0 0.0
          %1813 = vmatpush.msra.mxu0 0.0
          %1814 = vmatpush.msra.mxu0 0.0
          %1815 = vmatpush.msra.mxu0 0.0
          %1816 = vmatpush.msra.mxu0 %v1336
          %1817 = vmatmul.f32.gmra.mxu0 %v1799
          %v1818 = vpop.f32.mrf.mxu0
          %v1819 = vadd.f32 0.0, %v1818
          %1820 = vdwg.mxu0
          %1822 = vset.pattern.permute.xlu0 0
          %1823 = vperm.xlu0 %1822, %v1703
          %v1824 = vpop.permute.xlu0 %1823
          %v1825 = vperm.slane %v1824, %v1537
          %v1826 = vsel %vm1561, %v1825, 0
          %1828 = vmatpush.msra.mxu0 0.0
          %1829 = vmatpush.msra.mxu0 0.0
          %1830 = vmatpush.msra.mxu0 0.0
          %1831 = vmatpush.msra.mxu0 0.0
          %1832 = vmatpush.msra.mxu0 0.0
          %1833 = vmatpush.msra.mxu0 0.0
          %1834 = vmatpush.msra.mxu0 0.0
          %1835 = vmatpush.msra.mxu0 0.0
          %1836 = vmatpush.msra.mxu0 0.0
          %1837 = vmatpush.msra.mxu0 0.0
          %1838 = vmatpush.msra.mxu0 0.0
          %1839 = vmatpush.msra.mxu0 0.0
          %1840 = vmatpush.msra.mxu0 0.0
          %1841 = vmatpush.msra.mxu0 0.0
          %1842 = vmatpush.msra.mxu0 0.0
          %1843 = vmatpush.msra.mxu0 %v1337
          %1844 = vmatmul.f32.gmra.mxu0 %v1826
          %v1845 = vpop.f32.mrf.mxu0
          %v1846 = vadd.f32 0.0, %v1845
          %1847 = vdwg.mxu0
          %1849 = vset.pattern.permute.xlu0 0
          %1850 = vperm.xlu0 %1849, %v1718
          %v1851 = vpop.permute.xlu0 %1850
          %v1852 = vperm.slane %v1851, %v1537
          %v1853 = vsel %vm1561, %v1852, 0
          %1855 = vmatpush.msra.mxu0 0.0
          %1856 = vmatpush.msra.mxu0 0.0
          %1857 = vmatpush.msra.mxu0 0.0
          %1858 = vmatpush.msra.mxu0 0.0
          %1859 = vmatpush.msra.mxu0 0.0
          %1860 = vmatpush.msra.mxu0 0.0
          %1861 = vmatpush.msra.mxu0 0.0
          %1862 = vmatpush.msra.mxu0 0.0
          %1863 = vmatpush.msra.mxu0 0.0
          %1864 = vmatpush.msra.mxu0 0.0
          %1865 = vmatpush.msra.mxu0 0.0
          %1866 = vmatpush.msra.mxu0 0.0
          %1867 = vmatpush.msra.mxu0 0.0
          %1868 = vmatpush.msra.mxu0 0.0
          %1869 = vmatpush.msra.mxu0 0.0
          %1870 = vmatpush.msra.mxu0 %v1338
          %1871 = vmatmul.f32.gmra.mxu0 %v1853
          %v1872 = vpop.f32.mrf.mxu0
          %v1873 = vadd.f32 0.0, %v1872
          %1874 = vdwg.mxu0
          %1876 = vset.pattern.permute.xlu0 0
          %1877 = vperm.xlu0 %1876, %v1733
          %v1878 = vpop.permute.xlu0 %1877
          %v1879 = vperm.slane %v1878, %v1537
          %v1880 = vsel %vm1561, %v1879, 0
          %1882 = vmatpush.msra.mxu0 0.0
          %1883 = vmatpush.msra.mxu0 0.0
          %1884 = vmatpush.msra.mxu0 0.0
          %1885 = vmatpush.msra.mxu0 0.0
          %1886 = vmatpush.msra.mxu0 0.0
          %1887 = vmatpush.msra.mxu0 0.0
          %1888 = vmatpush.msra.mxu0 0.0
          %1889 = vmatpush.msra.mxu0 0.0
          %1890 = vmatpush.msra.mxu0 0.0
          %1891 = vmatpush.msra.mxu0 0.0
          %1892 = vmatpush.msra.mxu0 0.0
          %1893 = vmatpush.msra.mxu0 0.0
          %1894 = vmatpush.msra.mxu0 0.0
          %1895 = vmatpush.msra.mxu0 0.0
          %1896 = vmatpush.msra.mxu0 0.0
          %1897 = vmatpush.msra.mxu0 %v1339
          %1898 = vmatmul.f32.gmra.mxu0 %v1880
          %v1899 = vpop.f32.mrf.mxu0
          %v1900 = vadd.f32 0.0, %v1899
          %1901 = vdwg.mxu0
          %1903 = vset.pattern.permute.xlu0 0
          %1904 = vperm.xlu0 %1903, %v1748
          %v1905 = vpop.permute.xlu0 %1904
          %v1906 = vperm.slane %v1905, %v1537
          %v1907 = vsel %vm1561, %v1906, 0
          %1909 = vmatpush.msra.mxu0 0.0
          %1910 = vmatpush.msra.mxu0 0.0
          %1911 = vmatpush.msra.mxu0 0.0
          %1912 = vmatpush.msra.mxu0 0.0
          %1913 = vmatpush.msra.mxu0 0.0
          %1914 = vmatpush.msra.mxu0 0.0
          %1915 = vmatpush.msra.mxu0 0.0
          %1916 = vmatpush.msra.mxu0 0.0
          %1917 = vmatpush.msra.mxu0 0.0
          %1918 = vmatpush.msra.mxu0 0.0
          %1919 = vmatpush.msra.mxu0 0.0
          %1920 = vmatpush.msra.mxu0 0.0
          %1921 = vmatpush.msra.mxu0 0.0
          %1922 = vmatpush.msra.mxu0 0.0
          %1923 = vmatpush.msra.mxu0 0.0
          %1924 = vmatpush.msra.mxu0 %v1340
          %1925 = vmatmul.f32.gmra.mxu0 %v1907
          %v1926 = vpop.f32.mrf.mxu0
          %v1927 = vadd.f32 0.0, %v1926
          %1928 = vdwg.mxu0
          %1930 = vset.pattern.permute.xlu0 0
          %1931 = vperm.xlu0 %1930, %v1763
          %v1932 = vpop.permute.xlu0 %1931
          %v1933 = vperm.slane %v1932, %v1537
          %v1934 = vsel %vm1561, %v1933, 0
          %1936 = vmatpush.msra.mxu0 0.0
          %1937 = vmatpush.msra.mxu0 0.0
          %1938 = vmatpush.msra.mxu0 0.0
          %1939 = vmatpush.msra.mxu0 0.0
          %1940 = vmatpush.msra.mxu0 0.0
          %1941 = vmatpush.msra.mxu0 0.0
          %1942 = vmatpush.msra.mxu0 0.0
          %1943 = vmatpush.msra.mxu0 0.0
          %1944 = vmatpush.msra.mxu0 0.0
          %1945 = vmatpush.msra.mxu0 0.0
          %1946 = vmatpush.msra.mxu0 0.0
          %1947 = vmatpush.msra.mxu0 0.0
          %1948 = vmatpush.msra.mxu0 0.0
          %1949 = vmatpush.msra.mxu0 0.0
          %1950 = vmatpush.msra.mxu0 0.0
          %1951 = vmatpush.msra.mxu0 %v1341
          %1952 = vmatmul.f32.gmra.mxu0 %v1934
          %v1953 = vpop.f32.mrf.mxu0
          %v1954 = vadd.f32 0.0, %v1953
          %1955 = vdwg.mxu0
          %1957 = vset.pattern.permute.xlu0 0
          %1958 = vperm.xlu0 %1957, %v1778
          %v1959 = vpop.permute.xlu0 %1958
          %v1960 = vperm.slane %v1959, %v1537
          %v1961 = vsel %vm1561, %v1960, 0
          %1963 = vmatpush.msra.mxu0 0.0
          %1964 = vmatpush.msra.mxu0 0.0
          %1965 = vmatpush.msra.mxu0 0.0
          %1966 = vmatpush.msra.mxu0 0.0
          %1967 = vmatpush.msra.mxu0 0.0
          %1968 = vmatpush.msra.mxu0 0.0
          %1969 = vmatpush.msra.mxu0 0.0
          %1970 = vmatpush.msra.mxu0 0.0
          %1971 = vmatpush.msra.mxu0 0.0
          %1972 = vmatpush.msra.mxu0 0.0
          %1973 = vmatpush.msra.mxu0 0.0
          %1974 = vmatpush.msra.mxu0 0.0
          %1975 = vmatpush.msra.mxu0 0.0
          %1976 = vmatpush.msra.mxu0 0.0
          %1977 = vmatpush.msra.mxu0 0.0
          %1978 = vmatpush.msra.mxu0 %v1342
          %1979 = vmatmul.f32.gmra.mxu0 %v1961
          %v1980 = vpop.f32.mrf.mxu0
          %v1981 = vadd.f32 0.0, %v1980
          %1982 = vdwg.mxu0
          %1984 = vset.pattern.permute.xlu0 0
          %1985 = vperm.xlu0 %1984, %v1793
          %v1986 = vpop.permute.xlu0 %1985
          %v1987 = vperm.slane %v1986, %v1537
          %v1988 = vsel %vm1561, %v1987, 0
          %1990 = vmatpush.msra.mxu0 0.0
          %1991 = vmatpush.msra.mxu0 0.0
          %1992 = vmatpush.msra.mxu0 0.0
          %1993 = vmatpush.msra.mxu0 0.0
          %1994 = vmatpush.msra.mxu0 0.0
          %1995 = vmatpush.msra.mxu0 0.0
          %1996 = vmatpush.msra.mxu0 0.0
          %1997 = vmatpush.msra.mxu0 0.0
          %1998 = vmatpush.msra.mxu0 0.0
          %1999 = vmatpush.msra.mxu0 0.0
          %2000 = vmatpush.msra.mxu0 0.0
          %2001 = vmatpush.msra.mxu0 0.0
          %2002 = vmatpush.msra.mxu0 0.0
          %2003 = vmatpush.msra.mxu0 0.0
          %2004 = vmatpush.msra.mxu0 0.0
          %2005 = vmatpush.msra.mxu0 %v1343
          %2006 = vmatmul.f32.gmra.mxu0 %v1988
          %v2007 = vpop.f32.mrf.mxu0
          %v2008 = vadd.f32 0.0, %v2007
          %2009 = vdwg.mxu0
          %v2010 = vld [vmem:[#allocation10] sm:$0xff]
          %v2011 = vld [vmem:[#allocation10 + $0x8] sm:$0xff]
          %v2012 = vld [vmem:[#allocation10 + $0x10] sm:$0xff]
          %v2013 = vld [vmem:[#allocation10 + $0x18] sm:$0xff]
          %v2014 = vld [vmem:[%s11] sm:$0x1]
          %v2016 = vperm.slane %v2014, 0
          %2018 = vmatpush.msra.mxu0 0.0
          %2019 = vmatpush.msra.mxu0 0.0
          %2020 = vmatpush.msra.mxu0 0.0
          %2021 = vmatpush.msra.mxu0 0.0
          %2022 = vmatpush.msra.mxu0 0.0
          %2023 = vmatpush.msra.mxu0 0.0
          %2024 = vmatpush.msra.mxu0 0.0
          %2025 = vmatpush.msra.mxu0 0.0
          %2026 = vmatpush.msra.mxu0 0.0
          %2027 = vmatpush.msra.mxu0 0.0
          %2028 = vmatpush.msra.mxu0 0.0
          %2029 = vmatpush.msra.mxu0 0.0
          %2030 = vmatpush.msra.mxu0 %v2013
          %2031 = vmatpush.msra.mxu0 %v2012
          %2032 = vmatpush.msra.mxu0 %v2011
          %2033 = vmatpush.msra.mxu0 %v2010
          %2034 = vmatmul.f32.gmra.mxu0 %v1418
          %v2035 = vpop.f32.mrf.mxu0
          %v2036 = vadd.f32 %v2016, %v2035
          %2037 = vdwg.mxu0
          %v2038 = vmax.f32 %v2036, 0.0
          %v2039 = vld [vmem:[#allocation12] sm:$0xff]
          %v2040 = vld [vmem:[#allocation12 + $0x8] sm:$0xff]
          %v2041 = vld [vmem:[%s13] sm:$0x1]
          %v2043 = vperm.slane %v2041, 0
          %v2053 = vrot.slane %v1846, 7
          %v2054 = vsel %vm1546, %v2053, %v1819
          %v2055 = vrot.slane %v1873, 6
          %v2056 = vsel %vm1548, %v2055, %v2054
          %v2057 = vrot.slane %v1900, 5
          %v2058 = vsel %vm1550, %v2057, %v2056
          %v2059 = vrot.slane %v1927, 4
          %v2060 = vsel %vm1552, %v2059, %v2058
          %v2061 = vrot.slane %v1954, 3
          %v2062 = vsel %vm1554, %v2061, %v2060
          %v2063 = vrot.slane %v1981, 2
          %v2064 = vsel %vm1556, %v2063, %v2062
          %v2065 = vrot.slane %v2008, 1
          %v2066 = vsel %vm1558, %v2065, %v2064
          %v2067 = vsel %vm724, %v2066, 0
          %2069 = vmatpush.msra.mxu0 0.0
          %2070 = vmatpush.msra.mxu0 0.0
          %2071 = vmatpush.msra.mxu0 0.0
          %2072 = vmatpush.msra.mxu0 0.0
          %2073 = vmatpush.msra.mxu0 0.0
          %2074 = vmatpush.msra.mxu0 0.0
          %2075 = vmatpush.msra.mxu0 0.0
          %2076 = vmatpush.msra.mxu0 0.0
          %2077 = vmatpush.msra.mxu0 0.0
          %2078 = vmatpush.msra.mxu0 0.0
          %2079 = vmatpush.msra.mxu0 0.0
          %2080 = vmatpush.msra.mxu0 0.0
          %2081 = vmatpush.msra.mxu0 0.0
          %2082 = vmatpush.msra.mxu0 0.0
          %2083 = vmatpush.msra.mxu0 %v2040
          %2084 = vmatpush.msra.mxu0 %v2039
          %2085 = vmatmul.f32.gmra.mxu0 %v2067
          %v2086 = vpop.f32.mrf.mxu0
          %v2087 = vadd.f32 %v2043, %v2086
          %2088 = vdwg.mxu0
          %v2089 = vmax.f32 %v2087, 0.0
          %v2090 = vmul.f32 %v2038, %v2089
          %v2091 = vld [vmem:[#allocation13] sm:$0xff]
          %v2092 = vld [vmem:[#allocation13 + $0x8] sm:$0xff]
          %v2093 = vld [vmem:[#allocation13 + $0x10] sm:$0xff]
          %v2094 = vld [vmem:[#allocation13 + $0x18] sm:$0xff]
          %v2095 = vld [vmem:[%s15] sm:$0x1]
          %v2097 = vperm.slane %v2095, 0
          %v2100 = vsel %vm806, %v2090, 0
          %2102 = vmatpush.msra.mxu0 0.0
          %2103 = vmatpush.msra.mxu0 0.0
          %2104 = vmatpush.msra.mxu0 0.0
          %2105 = vmatpush.msra.mxu0 0.0
          %2106 = vmatpush.msra.mxu0 0.0
          %2107 = vmatpush.msra.mxu0 0.0
          %2108 = vmatpush.msra.mxu0 0.0
          %2109 = vmatpush.msra.mxu0 0.0
          %2110 = vmatpush.msra.mxu0 0.0
          %2111 = vmatpush.msra.mxu0 0.0
          %2112 = vmatpush.msra.mxu0 0.0
          %2113 = vmatpush.msra.mxu0 0.0
          %2114 = vmatpush.msra.mxu0 %v2094
          %2115 = vmatpush.msra.mxu0 %v2093
          %2116 = vmatpush.msra.mxu0 %v2092
          %2117 = vmatpush.msra.mxu0 %v2091
          %2118 = vmatmul.f32.gmra.mxu0 %v2100
          %v2119 = vpop.f32.mrf.mxu0
          %v2120 = vadd.f32 %v2097, %v2119
          %2121 = vdwg.mxu0
          %v2122 = vmax.f32 %v2120, 0.0
          %vm2123 = vcmask 523264
          %2124 = vst.msk [vmem:[#allocation3] sm:$0xff] %vm2123, %v2122
        $region124: #{tpu_custom_call.1} parent=91 // pred_fallthru
          _
        %v2125 = vld [vmem:[#allocation3] sm:$0xff]
        %v2126 = vld [vmem:[%s646] sm:$0xff]
        %v2127 = vld [vmem:[%s646 + $0x8] sm:$0xff]
        %v2128 = vld [vmem:[%s646 + $0x10] sm:$0xff]
        %v2129 = vld [vmem:[%s646 + $0x18] sm:$0xff]
        %v2130 = vld [vmem:[%s646 + $0x20] sm:$0xff]
        %v2131 = vld [vmem:[%s646 + $0x28] sm:$0xff]
        %v2132 = vld [vmem:[%s646 + $0x30] sm:$0xff]
        %v2133 = vld [vmem:[%s646 + $0x38] sm:$0xff]
        %v2134 = vld [vmem:[%s705] sm:$0x1]
        %v2136 = vperm.slane %v2134, 0
        %vm2138 = vcmask 523264
        %v2140 = vsel %vm2138, %v2125, 0
        %2142 = vmatpush.msra.mxu0 0.0
        %2143 = vmatpush.msra.mxu0 0.0
        %2144 = vmatpush.msra.mxu0 0.0
        %2145 = vmatpush.msra.mxu0 0.0
        %2146 = vmatpush.msra.mxu0 0.0
        %2147 = vmatpush.msra.mxu0 0.0
        %2148 = vmatpush.msra.mxu0 0.0
        %2149 = vmatpush.msra.mxu0 0.0
        %2150 = vmatpush.msra.mxu0 %v2133
        %2151 = vmatpush.msra.mxu0 %v2132
        %2152 = vmatpush.msra.mxu0 %v2131
        %2153 = vmatpush.msra.mxu0 %v2130
        %2154 = vmatpush.msra.mxu0 %v2129
        %2155 = vmatpush.msra.mxu0 %v2128
        %2156 = vmatpush.msra.mxu0 %v2127
        %2157 = vmatpush.msra.mxu0 %v2126
        %2158 = vmatmul.f32.gmra.mxu0 %v2140
        %v2159 = vpop.f32.mrf.mxu0
        %v2160 = vadd.f32 %v2136, %v2159
        %2161 = vdwg.mxu0
        %2162 = vst [vmem:[%s702] sm:$0xff] %v2160
        %s2163 = sand.u32 %s432, 1
        %s2164 = scalar_lea.sflag [#allocation6], %s2163
        %s2165 = sand.u32 %s432, 1
        %s2166 = smul.addr %s2165, 8
        %s2167 = scalar_lea.vmem [#allocation16], %s2166
        // Predicated region
        $region125: #{tpu_custom_call.1} parent=91 // pred_check
          %p2168 = pneg %p442
        $region126: #{tpu_custom_call.1} parent=91 // pred_check_branch
          %2170 = sbr.rel (%p2168) target = $region128
        $region127: #{tpu_custom_call.1} parent=91 // pred_region
          %2172 = vsyncadd %s2164, 0
          %s2173 = smul.addr %s36, 8
          %s2174 = scalar_lea.hbm %s18, %s2173
          %s2176 = sshll.u32 %s2167, 4
          %s2177 = int_to_ptr.vmem [resolvable:$true] %s2176
          %s2178 = sshll.u32 %s2174, 4
          %s2179 = int_to_ptr.hbm [resolvable:$true] %s2178
          %2181 = dma.vmem_to_hbm [thread:$0]  %s2177, 128, %s2179, %s2164
        $region128: #{tpu_custom_call.1} parent=91 // pred_fallthru
          _
      $region92: #{tpu_custom_call.1} parent=5 // pred_fallthru
        _
      %p2182 = scmp.le.s32.totalorder 2, %s31
      // Predicated region
      $region129: #{tpu_custom_call.1} parent=5 // pred_check
        %p2183 = pneg %p2182
      $region130: #{tpu_custom_call.1} parent=5 // pred_check_branch
        %2185 = sbr.rel (%p2183) target = $region132
      $region131: #{tpu_custom_call.1} parent=5 // pred_region
        %s2186 = ssub.s32 %s31, 2
        // Predicated region
        $region133: #{tpu_custom_call.1} parent=131 // pred_check
          %p2187 = pneg %p448
        $region134: #{tpu_custom_call.1} parent=131 // pred_check_branch
          %2189 = sbr.rel (%p2187) target = $region136
        $region135: #{tpu_custom_call.1} parent=131 // pred_region
          %s2190 = sand.u32 %s433, 1
          %s2191 = scalar_lea.sflag [#allocation6], %s2190
          %s2192 = sand.u32 %s433, 1
          %s2193 = smul.addr %s2192, 8
          %s2194 = scalar_lea.vmem [#allocation16], %s2193
          %2196 = dma.done %s2191, 128
        $region136: #{tpu_custom_call.1} parent=131 // pred_fallthru
          _
      $region132: #{tpu_custom_call.1} parent=5 // pred_fallthru
        _
    $region6: #{tpu_custom_call.1} parent=1 // loop_footer
      %s35 = sadd.s32 1, %s31
    $region7: #{tpu_custom_call.1} parent=1 // loop_footer_branch
      %30 = sbr.rel target = $region3
    $region8: #{tpu_custom_call.1} parent=1 // loop_exit
      _
    %2197 = vsyncpa [#allocation5], 1
    %s2198 = scalar_lea.sflag [#allocation5], 1
    %2199 = vsyncpa %s2198, 1
    %2200 = vsyncpa [#allocation8], 1
    %2201 = vsyncpa [#allocation11], 1
    %2202 = vsyncpa [#allocation14], 1
    %2203 = vsyncpa [#allocation6], 1
    %s2204 = scalar_lea.sflag [#allocation6], 1
    %2205 = vsyncpa %s2204, 1

</llo_original>
